<compile_context>
chip_gen: v6e
topology: v6e:2x2x1
jax: 0.10.0
libtpu: 0.0.40
codegen_flags: <defaults>
</compile_context>

<pallas_src>
import jax
import jax.numpy as jnp
from jax.experimental import pallas as pl
from jax.experimental.pallas import tpu as pltpu


def _ffn_kernel(x_ref, w1_ref, b1_ref, w2_ref, b2_ref, o_ref, acc_ref):
    """Fused FFN tile: partial relu(x @ W1 + b1) @ W2, reduced over mid slices.

    Grid = (row_tiles, mid_tiles); axis 1 (mid) is the reduction axis, with the
    per-row-tile output accumulated in a resident VMEM f32 scratch.
    """
    j = pl.program_id(1)

    @pl.when(j == 0)
    def _():
        acc_ref[...] = jnp.zeros_like(acc_ref)

    # First matmul (MXU, f32 accumulate) + bias + ReLU on this mid slice.
    h = jnp.dot(x_ref[...], w1_ref[...], preferred_element_type=jnp.float32)
    h = jnp.maximum(h + b1_ref[...].astype(jnp.float32), 0.0)

    # Second matmul: this mid slice's contribution to the output tile.
    acc_ref[...] += jnp.dot(h.astype(w2_ref.dtype), w2_ref[...],
                            preferred_element_type=jnp.float32)

    @pl.when(j == pl.num_programs(1) - 1)
    def _():
        o_ref[...] = (acc_ref[...] + b2_ref[...].astype(jnp.float32)).astype(o_ref.dtype)


def _round_up(x, m):
    return ((x + m - 1) // m) * m


def _pick_mid_tile(mid, preferred):
    # Reduction-axis tile MUST divide mid exactly (an overhanging mid block
    # would pollute the accumulator with garbage partial products).
    for t in (preferred, 512, 256, 128):
        if t <= mid and mid % t == 0:
            return t
    return mid  # block == full dim is always legal


def ffn_forward(x, w1, b1, w2, b2, *, tile_rows=256, tile_mid=512):
    """Fused MLP forward: relu(x @ w1 + b1) @ w2 + b2 (dropout = eval/identity).

    x: (..., in_size);  w1: (in_size, mid);  b1: (mid,)
    w2: (mid, out_size);  b2: (out_size,)
    """
    orig_shape = x.shape
    in_size = orig_shape[-1]
    mid = w1.shape[1]
    out_size = w2.shape[1]

    rows = 1
    for d in orig_shape[:-1]:
        rows *= d
    x2 = x.reshape(rows, in_size)
    b1r = b1.reshape(1, mid)
    b2r = b2.reshape(1, out_size)

    # Row tile: large enough to amortize per-grid-step overhead, capped so the
    # double-buffered x/W1/W2/out tiles (+ f32 accumulator) stay ~10-12 MiB,
    # i.e. comfortably inside v7x's smaller VMEM as well as v5e/v6e.
    # Must be a multiple of 8 (sublane tiling). Grid uses cdiv: the last row
    # block may overhang (OOB output rows are masked on store), so there is no
    # host-side padding copy of x.
    tm = min(tile_rows, _round_up(rows, 8))
    tj = _pick_mid_tile(mid, tile_mid)
    grid = (pl.cdiv(rows, tm), mid // tj)

    out = pl.pallas_call(
        _ffn_kernel,
        out_shape=jax.ShapeDtypeStruct((rows, out_size), x.dtype),
        grid_spec=pltpu.PrefetchScalarGridSpec(
            num_scalar_prefetch=0,
            grid=grid,
            in_specs=[
                pl.BlockSpec((tm, in_size), lambda i, j: (i, 0)),   # x tile
                pl.BlockSpec((in_size, tj), lambda i, j: (0, j)),   # W1 slice
                pl.BlockSpec((1, tj), lambda i, j: (0, j)),         # b1 slice
                pl.BlockSpec((tj, out_size), lambda i, j: (j, 0)),  # W2 slice
                pl.BlockSpec((1, out_size), lambda i, j: (0, 0)),   # b2 (resident)
            ],
            out_specs=pl.BlockSpec((tm, out_size), lambda i, j: (i, 0)),
            scratch_shapes=[pltpu.VMEM((tm, out_size), jnp.float32)],
        ),
        compiler_params=pltpu.CompilerParams(
            # "parallel" row axis shards across the 2 TensorCores on v7x;
            # mid axis is a reduction -> "arbitrary".
            dimension_semantics=("parallel", "arbitrary"),
            vmem_limit_bytes=64 * 1024 * 1024,
        ),
    )(x2, w1, b1r, w2, b2r)

    return out.reshape(orig_shape[:-1] + (out_size,))


if __name__ == "__main__":
    key = jax.random.PRNGKey(0)
    k_x, k_w1, k_b1, k_w2, k_b2 = jax.random.split(key, 5)

    batch, seq = 2, 8
    in_size, mid_size, out_size = 768, 768 * 4, 768  # as in FFN(): MLP(768, 3072, 768)

    x = jax.random.normal(k_x, (batch, seq, in_size), dtype=jnp.float32)
    # nn.Linear default init scale ~ 1/sqrt(fan_in); weights stored as (in, out)
    # so the kernel computes x @ W (== x @ W_torch.T).
    s1 = 1.0 / (in_size ** 0.5)
    s2 = 1.0 / (mid_size ** 0.5)
    w1 = jax.random.uniform(k_w1, (in_size, mid_size), jnp.float32, -s1, s1)
    b1 = jax.random.uniform(k_b1, (mid_size,), jnp.float32, -s1, s1)
    w2 = jax.random.uniform(k_w2, (mid_size, out_size), jnp.float32, -s2, s2)
    b2 = jax.random.uniform(k_b2, (out_size,), jnp.float32, -s2, s2)

    out = ffn_forward(x, w1, b1, w2, b2)
    out = jax.block_until_ready(out)

    # Reference (pure JAX, high precision): Linear -> ReLU -> (Dropout=identity) -> Linear
    x2 = x.reshape(-1, in_size)
    h_ref = jnp.maximum(
        jnp.dot(x2, w1, precision=jax.lax.Precision.HIGHEST) + b1, 0.0)
    ref = (jnp.dot(h_ref, w2, precision=jax.lax.Precision.HIGHEST) + b2
           ).reshape(batch, seq, out_size)

    assert out.shape == ref.shape, f"shape mismatch {out.shape} vs {ref.shape}"
    assert jnp.allclose(out, ref, atol=2e-2, rtol=2e-2), "mismatch vs reference"

    print("KERNEL_OK")
</pallas_src>

<mosaic_0001>
module attributes {stable_mosaic.version = 11 : i64} {
  func.func @_ffn_kernel(%arg0: i32, %arg1: i32, %arg2: memref<16x768xf32, #tpu.memory_space<vmem>>, %arg3: memref<768x512xf32, #tpu.memory_space<vmem>>, %arg4: memref<1x512xf32, #tpu.memory_space<vmem>>, %arg5: memref<512x768xf32, #tpu.memory_space<vmem>>, %arg6: memref<1x768xf32, #tpu.memory_space<vmem>>, %arg7: memref<16x768xf32, #tpu.memory_space<vmem>>, %arg8: memref<16x768xf32, #tpu.memory_space<vmem>>) attributes {dimension_semantics = [#tpu.dimension_semantics<parallel>, #tpu.dimension_semantics<arbitrary>], iteration_bounds = array<i64: 1, 6>, scalar_prefetch = 0 : i64, scratch_operands = 1 : i64, tpu.core_type = #tpu.core_type<tc>, window_params = [{transform_indices = @transform_0, window_bounds = array<i64: 16, 768>}, {transform_indices = @transform_1, window_bounds = array<i64: 768, 512>}, {transform_indices = @transform_2, window_bounds = array<i64: 1, 512>}, {transform_indices = @transform_3, window_bounds = array<i64: 512, 768>}, {pipeline_mode = #tpu.pipeline_mode<synchronous>, transform_indices = @transform_4, window_bounds = array<i64: 1, 768>}, {transform_indices = @transform_5, window_bounds = array<i64: 16, 768>}]} {
    %c0_i32 = arith.constant 0 : i32
    %0 = arith.cmpi eq, %arg1, %c0_i32 : i32
    %1 = arith.extui %0 : i1 to i32
    %c0_i32_0 = arith.constant 0 : i32
    %2 = arith.cmpi ne, %1, %c0_i32_0 : i32
    scf.if %2 {
      %cst_15 = arith.constant 0.000000e+00 : f32
      %19 = vector.broadcast %cst_15 : f32 to vector<16x768xf32>
      %c0_16 = arith.constant 0 : index
      %c0_17 = arith.constant 0 : index
      %20 = vector.load %arg8[%c0_16, %c0_17] : memref<16x768xf32, #tpu.memory_space<vmem>>, vector<16x768xf32>
      tpu.vector_store %arg8[%c0_16, %c0_17], %19 {strides = array<i32>} : memref<16x768xf32, #tpu.memory_space<vmem>>, vector<16x768xf32>,
    } else {
    }
    %c0 = arith.constant 0 : index
    %c0_1 = arith.constant 0 : index
    %3 = vector.load %arg2[%c0, %c0_1] : memref<16x768xf32, #tpu.memory_space<vmem>>, vector<16x768xf32>
    %c0_2 = arith.constant 0 : index
    %c0_3 = arith.constant 0 : index
    %4 = vector.load %arg3[%c0_2, %c0_3] : memref<768x512xf32, #tpu.memory_space<vmem>>, vector<768x512xf32>
    %cst = arith.constant dense<0.000000e+00> : vector<16x512xf32>
    %5 = tpu.matmul %3, %4, %cst {dimension_numbers = #tpu.dot_dimension_numbers<[1], [0], [0], [1], [0, 0, 1, 1], [], []>} : vector<16x768xf32>, vector<768x512xf32>, vector<16x512xf32> -> vector<16x512xf32>
    %c0_4 = arith.constant 0 : index
    %c0_5 = arith.constant 0 : index
    %6 = vector.load %arg4[%c0_4, %c0_5] : memref<1x512xf32, #tpu.memory_space<vmem>>, vector<1x512xf32>
    %7 = vector.broadcast %6 : vector<1x512xf32> to vector<16x512xf32>
    %8 = arith.addf %5, %7 : vector<16x512xf32>
    %cst_6 = arith.constant 0.000000e+00 : f32
    %9 = vector.broadcast %cst_6 : f32 to vector<16x512xf32>
    %10 = arith.maximumf %8, %9 : vector<16x512xf32>
    %c0_7 = arith.constant 0 : index
    %c0_8 = arith.constant 0 : index
    %11 = vector.load %arg8[%c0_7, %c0_8] : memref<16x768xf32, #tpu.memory_space<vmem>>, vector<16x768xf32>
    %c0_9 = arith.constant 0 : index
    %c0_10 = arith.constant 0 : index
    %12 = vector.load %arg5[%c0_9, %c0_10] : memref<512x768xf32, #tpu.memory_space<vmem>>, vector<512x768xf32>
    %cst_11 = arith.constant dense<0.000000e+00> : vector<16x768xf32>
    %13 = tpu.matmul %10, %12, %cst_11 {dimension_numbers = #tpu.dot_dimension_numbers<[1], [0], [0], [1], [0, 0, 1, 1], [], []>} : vector<16x512xf32>, vector<512x768xf32>, vector<16x768xf32> -> vector<16x768xf32>
    %14 = arith.addf %11, %13 : vector<16x768xf32>
    %c0_12 = arith.constant 0 : index
    %c0_13 = arith.constant 0 : index
    %15 = vector.load %arg8[%c0_12, %c0_13] : memref<16x768xf32, #tpu.memory_space<vmem>>, vector<16x768xf32>
    tpu.vector_store %arg8[%c0_12, %c0_13], %14 {strides = array<i32>} : memref<16x768xf32, #tpu.memory_space<vmem>>, vector<16x768xf32>,
    %c5_i32 = arith.constant 5 : i32
    %16 = arith.cmpi eq, %arg1, %c5_i32 : i32
    %17 = arith.extui %16 : i1 to i32
    %c0_i32_14 = arith.constant 0 : i32
    %18 = arith.cmpi ne, %17, %c0_i32_14 : i32
    scf.if %18 {
      %c0_15 = arith.constant 0 : index
      %c0_16 = arith.constant 0 : index
      %19 = vector.load %arg8[%c0_15, %c0_16] : memref<16x768xf32, #tpu.memory_space<vmem>>, vector<16x768xf32>
      %c0_17 = arith.constant 0 : index
      %c0_18 = arith.constant 0 : index
      %20 = vector.load %arg6[%c0_17, %c0_18] : memref<1x768xf32, #tpu.memory_space<vmem>>, vector<1x768xf32>
      %21 = vector.broadcast %20 : vector<1x768xf32> to vector<16x768xf32>
      %22 = arith.addf %19, %21 : vector<16x768xf32>
      %c0_19 = arith.constant 0 : index
      %c0_20 = arith.constant 0 : index
      %23 = vector.load %arg7[%c0_19, %c0_20] : memref<16x768xf32, #tpu.memory_space<vmem>>, vector<16x768xf32>
      tpu.vector_store %arg7[%c0_19, %c0_20], %22 {strides = array<i32>} : memref<16x768xf32, #tpu.memory_space<vmem>>, vector<16x768xf32>,
    } else {
    }
    return
  }
  func.func @transform_0(%arg0: i32, %arg1: i32) -> (i32, i32) {
    %c0_i32 = arith.constant 0 : i32
    %c0_i32_0 = arith.constant 0 : i32
    return %arg0, %c0_i32 : i32, i32
  }
  func.func @transform_1(%arg0: i32, %arg1: i32) -> (i32, i32) {
    %c0_i32 = arith.constant 0 : i32
    %c0_i32_0 = arith.constant 0 : i32
    return %c0_i32, %arg1 : i32, i32
  }
  func.func @transform_2(%arg0: i32, %arg1: i32) -> (i32, i32) {
    %c0_i32 = arith.constant 0 : i32
    %c0_i32_0 = arith.constant 0 : i32
    return %c0_i32, %arg1 : i32, i32
  }
  func.func @transform_3(%arg0: i32, %arg1: i32) -> (i32, i32) {
    %c0_i32 = arith.constant 0 : i32
    %c0_i32_0 = arith.constant 0 : i32
    return %arg1, %c0_i32 : i32, i32
  }
  func.func @transform_4(%arg0: i32, %arg1: i32) -> (i32, i32) {
    %c0_i32 = arith.constant 0 : i32
    %c0_i32_0 = arith.constant 0 : i32
    %c0_i32_1 = arith.constant 0 : i32
    return %c0_i32, %c0_i32_0 : i32, i32
  }
  func.func @transform_5(%arg0: i32, %arg1: i32) -> (i32, i32) {
    %c0_i32 = arith.constant 0 : i32
    %c0_i32_0 = arith.constant 0 : i32
    return %arg0, %c0_i32 : i32, i32
  }
}

</mosaic_0001>

<llo_original>
// kernel: tpu_custom_call.1
$region0: #{tpu_custom_call.1}
  #allocation0 [shape = 'u32[]', space=smem, size = 0x4, offset = 0x4, fixed_abs, tag = 'smem constant byte address 0x4 - core index']
  #allocation1 [shape = 'u32[144,128]{1,0:T(1,128)}', space=vmem, size = 0x12000, scoped, tag = 'internal scratch']
  #allocation2 [shape = 'f32[16,768]{1,0:T(8,128)}', space=vmem, size = 0xc000, scoped, tag = 'scratch operand']
  %s0 = inlined_call_operand.hbm [shape: f32[16,768], index: 0, kind: input, shape index: {}]
  %s1 = inlined_call_operand.hbm [shape: f32[768,3072], index: 1, kind: input, shape index: {}]
  %s2 = inlined_call_operand.hbm [shape: f32[1,3072], index: 2, kind: input, shape index: {}]
  %s3 = inlined_call_operand.hbm [shape: f32[3072,768], index: 3, kind: input, shape index: {}]
  %s4 = inlined_call_operand.hbm [shape: f32[1,768], index: 4, kind: input, shape index: {}]
  %s5 = inlined_call_operand.hbm [shape: f32[16,768], index: 5, kind: output, shape index: {}]
  %s6 = sld [smem:[#allocation0]]
  $region81: #{tpu_custom_call.1} parent=0
    _
  %s8 = ssub.s32 1, %s6
  %s9 = scalar_select 0, %s8, %s6
  $region1: #{tpu_custom_call.1} parent=0
    #allocation3 [shape = 'u8[49152]{0}', space=vmem, size = 0xc000, scoped, tag = 'input window, operand 0, single buffered']
    #allocation4 [shape = 's32[2]{0}', space=sflag, size = 0x8, scoped, tag = 'scoped memory for tpu_custom_call.1']
    #allocation5 [shape = 's32[2]{0}', space=sflag, size = 0x8, scoped, tag = 'scoped memory for tpu_custom_call.1']
    #allocation6 [shape = 'u8[3145728]{0}', space=vmem, size = 0x300000, scoped, tag = 'input window, operand 1']
    #allocation7 [shape = 's32[2]{0}', space=sflag, size = 0x8, scoped, tag = 'scoped memory for tpu_custom_call.1']
    #allocation8 [shape = 'u8[4096]{0}', space=vmem, size = 0x1000, scoped, tag = 'input window, operand 2']
    #allocation9 [shape = 'u8[3145728]{0}', space=vmem, size = 0x300000, scoped, tag = 'input window, operand 3']
    #allocation10 [shape = 's32[2]{0}', space=sflag, size = 0x8, scoped, tag = 'scoped memory for tpu_custom_call.1']
    #allocation11 [shape = 'u8[3072]{0}', space=vmem, size = 0xc00, scoped, tag = 'input window, operand 4, single buffered']
    #allocation12 [shape = 'u8[49152]{0}', space=vmem, size = 0xc000, scoped, tag = 'output window, operand 0, single buffered']
    %10 = vsyncpa [#allocation4], 0
    %11 = vsyncpa [#allocation7], 0
    %s12 = scalar_lea.sflag [#allocation7], 1
    %13 = vsyncpa %s12, 0
    %14 = vsyncpa [#allocation10], 0
    %s15 = scalar_lea.sflag [#allocation10], 1
    %16 = vsyncpa %s15, 0
    %17 = vsyncpa [#allocation5], 0
    loop: start=0, step=1, limit=8
    $region2: #{tpu_custom_call.1} parent=1 // loop_pre_header
      _
    $region3: #{tpu_custom_call.1} parent=1 // loop_header
      %s19 = sphi 0, %s23
      %p20 = scmp.ge.s32.totalorder %s19, 8
      %s26 = sphi 0, %s38
      %s27 = sphi 0, %s34
      %s28 = sphi 0, %s26
      %s29 = sphi 0, %s27
      %s30 = sphi 0, %s28
      %s31 = sphi 0, %s29
      %s41 = sphi 0, %s43
      %s44 = sphi 0, %s41
      %s45 = sphi 0, %s44
      %s61 = sphi 0, %s45
      %s67 = sphi 0, %s69
      %s70 = sphi 0, %s67
      %s71 = sphi 0, %s70
      %s87 = sphi 0, %s71
      %s93 = sphi 0, %s95
      %s96 = sphi 0, %s93
      %s97 = sphi 0, %s96
      %s113 = sphi 0, %s97
      %s119 = sphi 0, %s121
      %s122 = sphi 0, %s119
      %s123 = sphi 0, %s122
      %s139 = sphi 0, %s123
      %s143 = sphi 0, %s143
      %s145 = sphi 0, %s143
      %s146 = sphi 0, %s145
      %s160 = sphi 0, %s146
      %s166 = sphi 0, %s168
      %s169 = sphi 0, %s166
      %s170 = sphi 0, %s169
      %s186 = sphi 0, %s170
    $region4: #{tpu_custom_call.1} parent=1 // loop_header_branch
      %22 = sbr.rel (%p20) target = $region8
    $region5: #{tpu_custom_call.1} parent=1 // loop_body
      %s24 = ssub.s32 %s19, 1
      %s25 = ssub.s32 %s19, 2
      %s32 = sadd.s32 1, %s27
      %p33 = scmp.ge.s32.totalorder %s32, 6
      %s34 = scalar_select %p33, 0, %s32
      %s35 = sadd.s32 1, %s26
      %s36 = scalar_select %p33, %s35, %s26
      %p37 = scmp.ge.s32.totalorder %s36, 1
      %s38 = scalar_select %p37, 0, %s36
      %s39 = ssub.s32 %s26, %s38
      %p40 = scmp.eq.s32.totalorder %s39, 0
      %s42 = sadd.s32 %s41, 1
      %s43 = scalar_select %p40, %s41, %s42
      %p46 = pneg %p40
      %p47 = scmp.eq.s32.totalorder %s19, 5
      %p48 = por %p46, %p47
      %p49 = scmp.ne.s32.totalorder %s41, %s44
      %p50 = scmp.eq.s32.totalorder %s19, 0
      %p51 = por %p49, %p50
      %p52 = scmp.ne.s32.totalorder %s41, %s44
      %p53 = scmp.eq.s32.totalorder %s24, 5
      %p54 = por %p52, %p53
      %p55 = scmp.ne.s32.totalorder %s44, %s45
      %p56 = scmp.eq.s32.totalorder %s24, 0
      %p57 = por %p55, %p56
      %p58 = scmp.ne.s32.totalorder %s44, %s45
      %p59 = scmp.eq.s32.totalorder %s25, 5
      %p60 = por %p58, %p59
      %p62 = scmp.ne.s32.totalorder %s45, %s61
      %p63 = scmp.eq.s32.totalorder %s25, 0
      %p64 = por %p62, %p63
      %s65 = ssub.s32 %s27, %s34
      %p66 = scmp.eq.s32.totalorder %s65, 0
      %s68 = sadd.s32 %s67, 1
      %s69 = scalar_select %p66, %s67, %s68
      %p72 = pneg %p66
      %p73 = scmp.eq.s32.totalorder %s19, 5
      %p74 = por %p72, %p73
      %p75 = scmp.ne.s32.totalorder %s67, %s70
      %p76 = scmp.eq.s32.totalorder %s19, 0
      %p77 = por %p75, %p76
      %p78 = scmp.ne.s32.totalorder %s67, %s70
      %p79 = scmp.eq.s32.totalorder %s24, 5
      %p80 = por %p78, %p79
      %p81 = scmp.ne.s32.totalorder %s70, %s71
      %p82 = scmp.eq.s32.totalorder %s24, 0
      %p83 = por %p81, %p82
      %p84 = scmp.ne.s32.totalorder %s70, %s71
      %p85 = scmp.eq.s32.totalorder %s25, 5
      %p86 = por %p84, %p85
      %p88 = scmp.ne.s32.totalorder %s71, %s87
      %p89 = scmp.eq.s32.totalorder %s25, 0
      %p90 = por %p88, %p89
      %s91 = ssub.s32 %s27, %s34
      %p92 = scmp.eq.s32.totalorder %s91, 0
      %s94 = sadd.s32 %s93, 1
      %s95 = scalar_select %p92, %s93, %s94
      %p98 = pneg %p92
      %p99 = scmp.eq.s32.totalorder %s19, 5
      %p100 = por %p98, %p99
      %p101 = scmp.ne.s32.totalorder %s93, %s96
      %p102 = scmp.eq.s32.totalorder %s19, 0
      %p103 = por %p101, %p102
      %p104 = scmp.ne.s32.totalorder %s93, %s96
      %p105 = scmp.eq.s32.totalorder %s24, 5
      %p106 = por %p104, %p105
      %p107 = scmp.ne.s32.totalorder %s96, %s97
      %p108 = scmp.eq.s32.totalorder %s24, 0
      %p109 = por %p107, %p108
      %p110 = scmp.ne.s32.totalorder %s96, %s97
      %p111 = scmp.eq.s32.totalorder %s25, 5
      %p112 = por %p110, %p111
      %p114 = scmp.ne.s32.totalorder %s97, %s113
      %p115 = scmp.eq.s32.totalorder %s25, 0
      %p116 = por %p114, %p115
      %s117 = ssub.s32 %s27, %s34
      %p118 = scmp.eq.s32.totalorder %s117, 0
      %s120 = sadd.s32 %s119, 1
      %s121 = scalar_select %p118, %s119, %s120
      %p124 = pneg %p118
      %p125 = scmp.eq.s32.totalorder %s19, 5
      %p126 = por %p124, %p125
      %p127 = scmp.ne.s32.totalorder %s119, %s122
      %p128 = scmp.eq.s32.totalorder %s19, 0
      %p129 = por %p127, %p128
      %p130 = scmp.ne.s32.totalorder %s119, %s122
      %p131 = scmp.eq.s32.totalorder %s24, 5
      %p132 = por %p130, %p131
      %p133 = scmp.ne.s32.totalorder %s122, %s123
      %p134 = scmp.eq.s32.totalorder %s24, 0
      %p135 = por %p133, %p134
      %p136 = scmp.ne.s32.totalorder %s122, %s123
      %p137 = scmp.eq.s32.totalorder %s25, 5
      %p138 = por %p136, %p137
      %p140 = scmp.ne.s32.totalorder %s123, %s139
      %p141 = scmp.eq.s32.totalorder %s25, 0
      %p142 = por %p140, %p141
      %s144 = sadd.s32 %s143, 1
      %p147 = scmp.eq.s32.totalorder %s19, 5
      %p148 = scmp.ne.s32.totalorder %s143, %s145
      %p149 = scmp.eq.s32.totalorder %s19, 0
      %p150 = por %p148, %p149
      %p151 = scmp.ne.s32.totalorder %s143, %s145
      %p152 = scmp.eq.s32.totalorder %s24, 5
      %p153 = por %p151, %p152
      %p154 = scmp.ne.s32.totalorder %s145, %s146
      %p155 = scmp.eq.s32.totalorder %s24, 0
      %p156 = por %p154, %p155
      %p157 = scmp.ne.s32.totalorder %s145, %s146
      %p158 = scmp.eq.s32.totalorder %s25, 5
      %p159 = por %p157, %p158
      %p161 = scmp.ne.s32.totalorder %s146, %s160
      %p162 = scmp.eq.s32.totalorder %s25, 0
      %p163 = por %p161, %p162
      %s164 = ssub.s32 %s26, %s38
      %p165 = scmp.eq.s32.totalorder %s164, 0
      %s167 = sadd.s32 %s166, 1
      %s168 = scalar_select %p165, %s166, %s167
      %p171 = pneg %p165
      %p172 = scmp.eq.s32.totalorder %s19, 5
      %p173 = por %p171, %p172
      %p174 = scmp.ne.s32.totalorder %s166, %s169
      %p175 = scmp.eq.s32.totalorder %s19, 0
      %p176 = por %p174, %p175
      %p177 = scmp.ne.s32.totalorder %s166, %s169
      %p178 = scmp.eq.s32.totalorder %s24, 5
      %p179 = por %p177, %p178
      %p180 = scmp.ne.s32.totalorder %s169, %s170
      %p181 = scmp.eq.s32.totalorder %s24, 0
      %p182 = por %p180, %p181
      %p183 = scmp.ne.s32.totalorder %s169, %s170
      %p184 = scmp.eq.s32.totalorder %s25, 5
      %p185 = por %p183, %p184
      %p187 = scmp.ne.s32.totalorder %s170, %s186
      %p188 = scmp.eq.s32.totalorder %s25, 0
      %p189 = por %p187, %p188
      %p190 = scmp.le.s32.totalorder 1, %s19
      %p191 = scmp.lt.s32.totalorder %s19, 7
      %p192 = pnand %p190, %p191
      %p193 = pneg %p192
      // Predicated region
      $region9: #{tpu_custom_call.1} parent=5 // pred_check
        _
      $region10: #{tpu_custom_call.1} parent=5 // pred_check_branch
        %195 = sbr.rel (%p192) target = $region12
      $region11: #{tpu_custom_call.1} parent=5 // pred_region
        %s196 = ssub.s32 %s19, 1
        // Predicated region
        $region13: #{tpu_custom_call.1} parent=11 // pred_check
          %p197 = pneg %p57
        $region14: #{tpu_custom_call.1} parent=11 // pred_check_branch
          %199 = sbr.rel (%p197) target = $region16
        $region15: #{tpu_custom_call.1} parent=11 // pred_region
          %s200 = smul.u32 2, %s28
          %s202 = ssub.s32 1536, 1536
          %203 = vsyncadd [#allocation4], %s202
          %s204 = smul.addr %s200, 6
          %s205 = smul.addr %s204, 128
          %s206 = scalar_lea.hbm %s0, %s205
          %s207 = sshll.u32 [#allocation3], 4
          %s208 = int_to_ptr.vmem [resolvable:$true] %s207
          %213 = dma.hbm_to_vmem [thread:$0]  %s206, 1536, %s208, [#allocation4], 768, 768, 48
        $region16: #{tpu_custom_call.1} parent=11 // pred_fallthru
          _
        // Predicated region
        $region17: #{tpu_custom_call.1} parent=11 // pred_check
          %p214 = pneg %p156
        $region18: #{tpu_custom_call.1} parent=11 // pred_check_branch
          %216 = sbr.rel (%p214) target = $region20
        $region19: #{tpu_custom_call.1} parent=11 // pred_region
          %s218 = ssub.s32 96, 96
          %219 = vsyncadd [#allocation10], %s218
          %s221 = sshll.u32 [#allocation11], 4
          %s222 = int_to_ptr.vmem [resolvable:$true] %s221
          %224 = dma.hbm_to_vmem [thread:$0]  %s4, 96, %s222, [#allocation10]
        $region20: #{tpu_custom_call.1} parent=11 // pred_fallthru
          _
      $region12: #{tpu_custom_call.1} parent=5 // pred_fallthru
        _
      %p225 = scmp.lt.s32.totalorder %s19, 6
      // Predicated region
      $region21: #{tpu_custom_call.1} parent=5 // pred_check
        %p226 = pneg %p225
      $region22: #{tpu_custom_call.1} parent=5 // pred_check_branch
        %228 = sbr.rel (%p226) target = $region24
      $region23: #{tpu_custom_call.1} parent=5 // pred_region
        // Predicated region
        $region25: #{tpu_custom_call.1} parent=23 // pred_check
          %p229 = pneg %p77
        $region26: #{tpu_custom_call.1} parent=23 // pred_check_branch
          %231 = sbr.rel (%p229) target = $region28
        $region27: #{tpu_custom_call.1} parent=23 // pred_region
          %s232 = sand.u32 %s19, 1
          %s233 = scalar_lea.sflag [#allocation7], %s232
          %s234 = sand.u32 %s67, 1
          %s235 = smul.addr %s234, 3072
          %s236 = scalar_lea.vmem [#allocation6], %s235
          %s237 = smul.u32 4, %s27
          %s239 = ssub.s32 49152, 49152
          %240 = vsyncadd %s233, %s239
          %s241 = smul.addr %s237, 128
          %s242 = scalar_lea.hbm %s1, %s241
          %s243 = sshll.u32 %s236, 4
          %s244 = int_to_ptr.vmem [resolvable:$true] %s243
          %249 = dma.hbm_to_vmem [thread:$0]  %s242, 49152, %s244, %s233, 3072, 512, 32
        $region28: #{tpu_custom_call.1} parent=23 // pred_fallthru
          _
        // Predicated region
        $region29: #{tpu_custom_call.1} parent=23 // pred_check
          %p250 = pneg %p103
        $region30: #{tpu_custom_call.1} parent=23 // pred_check_branch
          %252 = sbr.rel (%p250) target = $region32
        $region31: #{tpu_custom_call.1} parent=23 // pred_region
          %s253 = sand.u32 %s19, 1
          %s254 = scalar_lea.sflag [#allocation7], %s253
          %s255 = sand.u32 %s93, 1
          %s256 = smul.addr %s255, 4
          %s257 = scalar_lea.vmem [#allocation8], %s256
          %s258 = smul.u32 4, %s27
          %s260 = ssub.s32 64, 64
          %261 = vsyncadd %s254, %s260
          %s262 = smul.addr %s258, 16
          %s263 = scalar_lea.hbm %s2, %s262
          %s265 = sshll.u32 %s257, 4
          %s266 = int_to_ptr.vmem [resolvable:$true] %s265
          %268 = dma.hbm_to_vmem [thread:$0]  %s263, 64, %s266, %s254
        $region32: #{tpu_custom_call.1} parent=23 // pred_fallthru
          _
        // Predicated region
        $region33: #{tpu_custom_call.1} parent=23 // pred_check
          %p269 = pneg %p129
        $region34: #{tpu_custom_call.1} parent=23 // pred_check_branch
          %271 = sbr.rel (%p269) target = $region36
        $region35: #{tpu_custom_call.1} parent=23 // pred_region
          %s272 = sand.u32 %s19, 1
          %s273 = scalar_lea.sflag [#allocation10], %s272
          %s274 = sand.u32 %s119, 1
          %s275 = smul.addr %s274, 3072
          %s276 = scalar_lea.vmem [#allocation9], %s275
          %s277 = smul.u32 64, %s27
          %s279 = ssub.s32 49152, 49152
          %280 = vsyncadd %s273, %s279
          %s281 = smul.addr %s277, 6
          %s282 = smul.addr %s281, 128
          %s283 = scalar_lea.hbm %s3, %s282
          %s284 = sshll.u32 %s276, 4
          %s285 = int_to_ptr.vmem [resolvable:$true] %s284
          %290 = dma.hbm_to_vmem [thread:$0]  %s283, 49152, %s285, %s273, 768, 768, 48
        $region36: #{tpu_custom_call.1} parent=23 // pred_fallthru
          _
      $region24: #{tpu_custom_call.1} parent=5 // pred_fallthru
        _
      %p291 = scmp.le.s32.totalorder 1, %s19
      %p292 = scmp.lt.s32.totalorder %s19, 7
      %p293 = pnand %p291, %p292
      %p294 = pneg %p293
      // Predicated region
      $region37: #{tpu_custom_call.1} parent=5 // pred_check
        _
      $region38: #{tpu_custom_call.1} parent=5 // pred_check_branch
        %296 = sbr.rel (%p293) target = $region40
      $region39: #{tpu_custom_call.1} parent=5 // pred_region
        %s297 = ssub.s32 %s19, 1
        // Predicated region
        $region41: #{tpu_custom_call.1} parent=39 // pred_check
          %p298 = pneg %p57
        $region42: #{tpu_custom_call.1} parent=39 // pred_check_branch
          %300 = sbr.rel (%p298) target = $region44
        $region43: #{tpu_custom_call.1} parent=39 // pred_region
          %301 = dma.done [#allocation4], 1536
        $region44: #{tpu_custom_call.1} parent=39 // pred_fallthru
          _
        %s302 = sand.u32 %s24, 1
        %s303 = scalar_lea.sflag [#allocation7], %s302
        %s304 = sand.u32 %s70, 1
        %s305 = smul.addr %s304, 3072
        %s306 = scalar_lea.vmem [#allocation6], %s305
        // Predicated region
        $region45: #{tpu_custom_call.1} parent=39 // pred_check
          %p307 = pneg %p83
        $region46: #{tpu_custom_call.1} parent=39 // pred_check_branch
          %309 = sbr.rel (%p307) target = $region48
        $region47: #{tpu_custom_call.1} parent=39 // pred_region
          %310 = dma.done %s303, 49152
        $region48: #{tpu_custom_call.1} parent=39 // pred_fallthru
          _
        %s311 = sand.u32 %s24, 1
        %s312 = scalar_lea.sflag [#allocation7], %s311
        %s313 = sand.u32 %s96, 1
        %s314 = smul.addr %s313, 4
        %s315 = scalar_lea.vmem [#allocation8], %s314
        // Predicated region
        $region49: #{tpu_custom_call.1} parent=39 // pred_check
          %p316 = pneg %p109
        $region50: #{tpu_custom_call.1} parent=39 // pred_check_branch
          %318 = sbr.rel (%p316) target = $region52
        $region51: #{tpu_custom_call.1} parent=39 // pred_region
          %319 = dma.done %s312, 64
        $region52: #{tpu_custom_call.1} parent=39 // pred_fallthru
          _
        %s320 = sand.u32 %s24, 1
        %s321 = scalar_lea.sflag [#allocation10], %s320
        %s322 = sand.u32 %s122, 1
        %s323 = smul.addr %s322, 3072
        %s324 = scalar_lea.vmem [#allocation9], %s323
        // Predicated region
        $region53: #{tpu_custom_call.1} parent=39 // pred_check
          %p325 = pneg %p135
        $region54: #{tpu_custom_call.1} parent=39 // pred_check_branch
          %327 = sbr.rel (%p325) target = $region56
        $region55: #{tpu_custom_call.1} parent=39 // pred_region
          %328 = dma.done %s321, 49152
        $region56: #{tpu_custom_call.1} parent=39 // pred_fallthru
          _
        // Predicated region
        $region57: #{tpu_custom_call.1} parent=39 // pred_check
          %p329 = pneg %p156
        $region58: #{tpu_custom_call.1} parent=39 // pred_check_branch
          %331 = sbr.rel (%p329) target = $region60
        $region59: #{tpu_custom_call.1} parent=39 // pred_region
          %332 = dma.done [#allocation10], 96
        $region60: #{tpu_custom_call.1} parent=39 // pred_fallthru
          _
        %p333 = pneg %p57
        %p334 = pneg %p54
        %s335 = sand.u32 %s24, 1
        %s336 = scalar_lea.sflag [#allocation7], %s335
        %s337 = sand.u32 %s70, 1
        %s338 = smul.addr %s337, 3072
        %s339 = scalar_lea.vmem [#allocation6], %s338
        %p340 = pneg %p83
        %p341 = pneg %p80
        %s342 = sand.u32 %s24, 1
        %s343 = scalar_lea.sflag [#allocation7], %s342
        %s344 = sand.u32 %s96, 1
        %s345 = smul.addr %s344, 4
        %s346 = scalar_lea.vmem [#allocation8], %s345
        %p347 = pneg %p109
        %p348 = pneg %p106
        %s349 = sand.u32 %s24, 1
        %s350 = scalar_lea.sflag [#allocation10], %s349
        %s351 = sand.u32 %s122, 1
        %s352 = smul.addr %s351, 3072
        %s353 = scalar_lea.vmem [#allocation9], %s352
        %p354 = pneg %p135
        %p355 = pneg %p132
        %p356 = pneg %p156
        %p357 = pneg %p153
        %p358 = pneg %p182
        %p359 = pneg %p179
        %s360 = smul.u32 2, %s28
        %s361 = smul.u32 4, %s29
        %s362 = smul.u32 4, %s29
        %s363 = smul.u32 64, %s29
        %s364 = smul.u32 2, %s28
        %p365 = scmp.eq.s32.totalorder %s29, 0
        // Predicated region
        $region61: #{tpu_custom_call.1} parent=39 // pred_check
          %p366 = pneg %p365
        $region62: #{tpu_custom_call.1} parent=39 // pred_check_branch
          %368 = sbr.rel (%p366) target = $region64
        $region63: #{tpu_custom_call.1} parent=39 // pred_region
          %369 = vst [vmem:[#allocation2] sm:$0xff] 0.0
          %370 = vst [vmem:[#allocation2 + $0x8] sm:$0xff] 0.0
          %371 = vst [vmem:[#allocation2 + $0x10] sm:$0xff] 0.0
          %372 = vst [vmem:[#allocation2 + $0x18] sm:$0xff] 0.0
          %373 = vst [vmem:[#allocation2 + $0x20] sm:$0xff] 0.0
          %374 = vst [vmem:[#allocation2 + $0x28] sm:$0xff] 0.0
          %375 = vst [vmem:[#allocation2 + $0x30] sm:$0xff] 0.0
          %376 = vst [vmem:[#allocation2 + $0x38] sm:$0xff] 0.0
          %377 = vst [vmem:[#allocation2 + $0x40] sm:$0xff] 0.0
          %378 = vst [vmem:[#allocation2 + $0x48] sm:$0xff] 0.0
          %379 = vst [vmem:[#allocation2 + $0x50] sm:$0xff] 0.0
          %380 = vst [vmem:[#allocation2 + $0x58] sm:$0xff] 0.0
        $region64: #{tpu_custom_call.1} parent=39 // pred_fallthru
          _
        %v381 = vld [vmem:[#allocation3] sm:$0xff]
        %v382 = vld [vmem:[#allocation3 + $0x8] sm:$0xff]
        %v383 = vld [vmem:[#allocation3 + $0x10] sm:$0xff]
        %v384 = vld [vmem:[#allocation3 + $0x18] sm:$0xff]
        %v385 = vld [vmem:[#allocation3 + $0x20] sm:$0xff]
        %v386 = vld [vmem:[#allocation3 + $0x28] sm:$0xff]
        %v387 = vld [vmem:[#allocation3 + $0x30] sm:$0xff]
        %v388 = vld [vmem:[#allocation3 + $0x38] sm:$0xff]
        %v389 = vld [vmem:[#allocation3 + $0x40] sm:$0xff]
        %v390 = vld [vmem:[#allocation3 + $0x48] sm:$0xff]
        %v391 = vld [vmem:[#allocation3 + $0x50] sm:$0xff]
        %v392 = vld [vmem:[#allocation3 + $0x58] sm:$0xff]
        %v393 = vld [vmem:[%s306] sm:$0xff]
        %v394 = vld [vmem:[%s306 + $0x8] sm:$0xff]
        %v395 = vld [vmem:[%s306 + $0x10] sm:$0xff]
        %v396 = vld [vmem:[%s306 + $0x18] sm:$0xff]
        %v397 = vld [vmem:[%s306 + $0x20] sm:$0xff]
        %v398 = vld [vmem:[%s306 + $0x28] sm:$0xff]
        %v399 = vld [vmem:[%s306 + $0x30] sm:$0xff]
        %v400 = vld [vmem:[%s306 + $0x38] sm:$0xff]
        %v401 = vld [vmem:[%s306 + $0x40] sm:$0xff]
        %v402 = vld [vmem:[%s306 + $0x48] sm:$0xff]
        %v403 = vld [vmem:[%s306 + $0x50] sm:$0xff]
        %v404 = vld [vmem:[%s306 + $0x58] sm:$0xff]
        %v405 = vld [vmem:[%s306 + $0x60] sm:$0xff]
        %v406 = vld [vmem:[%s306 + $0x68] sm:$0xff]
        %v407 = vld [vmem:[%s306 + $0x70] sm:$0xff]
        %v408 = vld [vmem:[%s306 + $0x78] sm:$0xff]
        %v409 = vld [vmem:[%s306 + $0x80] sm:$0xff]
        %v410 = vld [vmem:[%s306 + $0x88] sm:$0xff]
        %v411 = vld [vmem:[%s306 + $0x90] sm:$0xff]
        %v412 = vld [vmem:[%s306 + $0x98] sm:$0xff]
        %v413 = vld [vmem:[%s306 + $0xa0] sm:$0xff]
        %v414 = vld [vmem:[%s306 + $0xa8] sm:$0xff]
        %v415 = vld [vmem:[%s306 + $0xb0] sm:$0xff]
        %v416 = vld [vmem:[%s306 + $0xb8] sm:$0xff]
        %v417 = vld [vmem:[%s306 + $0xc0] sm:$0xff]
        %v418 = vld [vmem:[%s306 + $0xc8] sm:$0xff]
        %v419 = vld [vmem:[%s306 + $0xd0] sm:$0xff]
        %v420 = vld [vmem:[%s306 + $0xd8] sm:$0xff]
        %v421 = vld [vmem:[%s306 + $0xe0] sm:$0xff]
        %v422 = vld [vmem:[%s306 + $0xe8] sm:$0xff]
        %v423 = vld [vmem:[%s306 + $0xf0] sm:$0xff]
        %v424 = vld [vmem:[%s306 + $0xf8] sm:$0xff]
        %v425 = vld [vmem:[%s306 + $0x100] sm:$0xff]
        %v426 = vld [vmem:[%s306 + $0x108] sm:$0xff]
        %v427 = vld [vmem:[%s306 + $0x110] sm:$0xff]
        %v428 = vld [vmem:[%s306 + $0x118] sm:$0xff]
        %v429 = vld [vmem:[%s306 + $0x120] sm:$0xff]
        %v430 = vld [vmem:[%s306 + $0x128] sm:$0xff]
        %v431 = vld [vmem:[%s306 + $0x130] sm:$0xff]
        %v432 = vld [vmem:[%s306 + $0x138] sm:$0xff]
        %v433 = vld [vmem:[%s306 + $0x140] sm:$0xff]
        %v434 = vld [vmem:[%s306 + $0x148] sm:$0xff]
        %v435 = vld [vmem:[%s306 + $0x150] sm:$0xff]
        %v436 = vld [vmem:[%s306 + $0x158] sm:$0xff]
        %v437 = vld [vmem:[%s306 + $0x160] sm:$0xff]
        %v438 = vld [vmem:[%s306 + $0x168] sm:$0xff]
        %v439 = vld [vmem:[%s306 + $0x170] sm:$0xff]
        %v440 = vld [vmem:[%s306 + $0x178] sm:$0xff]
        %v441 = vld [vmem:[%s306 + $0x180] sm:$0xff]
        %v442 = vld [vmem:[%s306 + $0x188] sm:$0xff]
        %v443 = vld [vmem:[%s306 + $0x190] sm:$0xff]
        %v444 = vld [vmem:[%s306 + $0x198] sm:$0xff]
        %v445 = vld [vmem:[%s306 + $0x1a0] sm:$0xff]
        %v446 = vld [vmem:[%s306 + $0x1a8] sm:$0xff]
        %v447 = vld [vmem:[%s306 + $0x1b0] sm:$0xff]
        %v448 = vld [vmem:[%s306 + $0x1b8] sm:$0xff]
        %v449 = vld [vmem:[%s306 + $0x1c0] sm:$0xff]
        %v450 = vld [vmem:[%s306 + $0x1c8] sm:$0xff]
        %v451 = vld [vmem:[%s306 + $0x1d0] sm:$0xff]
        %v452 = vld [vmem:[%s306 + $0x1d8] sm:$0xff]
        %v453 = vld [vmem:[%s306 + $0x1e0] sm:$0xff]
        %v454 = vld [vmem:[%s306 + $0x1e8] sm:$0xff]
        %v455 = vld [vmem:[%s306 + $0x1f0] sm:$0xff]
        %v456 = vld [vmem:[%s306 + $0x1f8] sm:$0xff]
        %v457 = vld [vmem:[%s306 + $0x200] sm:$0xff]
        %v458 = vld [vmem:[%s306 + $0x208] sm:$0xff]
        %v459 = vld [vmem:[%s306 + $0x210] sm:$0xff]
        %v460 = vld [vmem:[%s306 + $0x218] sm:$0xff]
        %v461 = vld [vmem:[%s306 + $0x220] sm:$0xff]
        %v462 = vld [vmem:[%s306 + $0x228] sm:$0xff]
        %v463 = vld [vmem:[%s306 + $0x230] sm:$0xff]
        %v464 = vld [vmem:[%s306 + $0x238] sm:$0xff]
        %v465 = vld [vmem:[%s306 + $0x240] sm:$0xff]
        %v466 = vld [vmem:[%s306 + $0x248] sm:$0xff]
        %v467 = vld [vmem:[%s306 + $0x250] sm:$0xff]
        %v468 = vld [vmem:[%s306 + $0x258] sm:$0xff]
        %v469 = vld [vmem:[%s306 + $0x260] sm:$0xff]
        %v470 = vld [vmem:[%s306 + $0x268] sm:$0xff]
        %v471 = vld [vmem:[%s306 + $0x270] sm:$0xff]
        %v472 = vld [vmem:[%s306 + $0x278] sm:$0xff]
        %v473 = vld [vmem:[%s306 + $0x280] sm:$0xff]
        %v474 = vld [vmem:[%s306 + $0x288] sm:$0xff]
        %v475 = vld [vmem:[%s306 + $0x290] sm:$0xff]
        %v476 = vld [vmem:[%s306 + $0x298] sm:$0xff]
        %v477 = vld [vmem:[%s306 + $0x2a0] sm:$0xff]
        %v478 = vld [vmem:[%s306 + $0x2a8] sm:$0xff]
        %v479 = vld [vmem:[%s306 + $0x2b0] sm:$0xff]
        %v480 = vld [vmem:[%s306 + $0x2b8] sm:$0xff]
        %v481 = vld [vmem:[%s306 + $0x2c0] sm:$0xff]
        %v482 = vld [vmem:[%s306 + $0x2c8] sm:$0xff]
        %v483 = vld [vmem:[%s306 + $0x2d0] sm:$0xff]
        %v484 = vld [vmem:[%s306 + $0x2d8] sm:$0xff]
        %v485 = vld [vmem:[%s306 + $0x2e0] sm:$0xff]
        %v486 = vld [vmem:[%s306 + $0x2e8] sm:$0xff]
        %v487 = vld [vmem:[%s306 + $0x2f0] sm:$0xff]
        %v488 = vld [vmem:[%s306 + $0x2f8] sm:$0xff]
        %v489 = vld [vmem:[%s306 + $0x300] sm:$0xff]
        %v490 = vld [vmem:[%s306 + $0x308] sm:$0xff]
        %v491 = vld [vmem:[%s306 + $0x310] sm:$0xff]
        %v492 = vld [vmem:[%s306 + $0x318] sm:$0xff]
        %v493 = vld [vmem:[%s306 + $0x320] sm:$0xff]
        %v494 = vld [vmem:[%s306 + $0x328] sm:$0xff]
        %v495 = vld [vmem:[%s306 + $0x330] sm:$0xff]
        %v496 = vld [vmem:[%s306 + $0x338] sm:$0xff]
        %v497 = vld [vmem:[%s306 + $0x340] sm:$0xff]
        %v498 = vld [vmem:[%s306 + $0x348] sm:$0xff]
        %v499 = vld [vmem:[%s306 + $0x350] sm:$0xff]
        %v500 = vld [vmem:[%s306 + $0x358] sm:$0xff]
        %v501 = vld [vmem:[%s306 + $0x360] sm:$0xff]
        %v502 = vld [vmem:[%s306 + $0x368] sm:$0xff]
        %v503 = vld [vmem:[%s306 + $0x370] sm:$0xff]
        %v504 = vld [vmem:[%s306 + $0x378] sm:$0xff]
        %v505 = vld [vmem:[%s306 + $0x380] sm:$0xff]
        %v506 = vld [vmem:[%s306 + $0x388] sm:$0xff]
        %v507 = vld [vmem:[%s306 + $0x390] sm:$0xff]
        %v508 = vld [vmem:[%s306 + $0x398] sm:$0xff]
        %v509 = vld [vmem:[%s306 + $0x3a0] sm:$0xff]
        %v510 = vld [vmem:[%s306 + $0x3a8] sm:$0xff]
        %v511 = vld [vmem:[%s306 + $0x3b0] sm:$0xff]
        %v512 = vld [vmem:[%s306 + $0x3b8] sm:$0xff]
        %v513 = vld [vmem:[%s306 + $0x3c0] sm:$0xff]
        %v514 = vld [vmem:[%s306 + $0x3c8] sm:$0xff]
        %v515 = vld [vmem:[%s306 + $0x3d0] sm:$0xff]
        %v516 = vld [vmem:[%s306 + $0x3d8] sm:$0xff]
        %v517 = vld [vmem:[%s306 + $0x3e0] sm:$0xff]
        %v518 = vld [vmem:[%s306 + $0x3e8] sm:$0xff]
        %v519 = vld [vmem:[%s306 + $0x3f0] sm:$0xff]
        %v520 = vld [vmem:[%s306 + $0x3f8] sm:$0xff]
        %v521 = vld [vmem:[%s306 + $0x400] sm:$0xff]
        %v522 = vld [vmem:[%s306 + $0x408] sm:$0xff]
        %v523 = vld [vmem:[%s306 + $0x410] sm:$0xff]
        %v524 = vld [vmem:[%s306 + $0x418] sm:$0xff]
        %v525 = vld [vmem:[%s306 + $0x420] sm:$0xff]
        %v526 = vld [vmem:[%s306 + $0x428] sm:$0xff]
        %v527 = vld [vmem:[%s306 + $0x430] sm:$0xff]
        %v528 = vld [vmem:[%s306 + $0x438] sm:$0xff]
        %v529 = vld [vmem:[%s306 + $0x440] sm:$0xff]
        %v530 = vld [vmem:[%s306 + $0x448] sm:$0xff]
        %v531 = vld [vmem:[%s306 + $0x450] sm:$0xff]
        %v532 = vld [vmem:[%s306 + $0x458] sm:$0xff]
        %v533 = vld [vmem:[%s306 + $0x460] sm:$0xff]
        %v534 = vld [vmem:[%s306 + $0x468] sm:$0xff]
        %v535 = vld [vmem:[%s306 + $0x470] sm:$0xff]
        %v536 = vld [vmem:[%s306 + $0x478] sm:$0xff]
        %v537 = vld [vmem:[%s306 + $0x480] sm:$0xff]
        %v538 = vld [vmem:[%s306 + $0x488] sm:$0xff]
        %v539 = vld [vmem:[%s306 + $0x490] sm:$0xff]
        %v540 = vld [vmem:[%s306 + $0x498] sm:$0xff]
        %v541 = vld [vmem:[%s306 + $0x4a0] sm:$0xff]
        %v542 = vld [vmem:[%s306 + $0x4a8] sm:$0xff]
        %v543 = vld [vmem:[%s306 + $0x4b0] sm:$0xff]
        %v544 = vld [vmem:[%s306 + $0x4b8] sm:$0xff]
        %v545 = vld [vmem:[%s306 + $0x4c0] sm:$0xff]
        %v546 = vld [vmem:[%s306 + $0x4c8] sm:$0xff]
        %v547 = vld [vmem:[%s306 + $0x4d0] sm:$0xff]
        %v548 = vld [vmem:[%s306 + $0x4d8] sm:$0xff]
        %v549 = vld [vmem:[%s306 + $0x4e0] sm:$0xff]
        %v550 = vld [vmem:[%s306 + $0x4e8] sm:$0xff]
        %v551 = vld [vmem:[%s306 + $0x4f0] sm:$0xff]
        %v552 = vld [vmem:[%s306 + $0x4f8] sm:$0xff]
        %v553 = vld [vmem:[%s306 + $0x500] sm:$0xff]
        %v554 = vld [vmem:[%s306 + $0x508] sm:$0xff]
        %v555 = vld [vmem:[%s306 + $0x510] sm:$0xff]
        %v556 = vld [vmem:[%s306 + $0x518] sm:$0xff]
        %v557 = vld [vmem:[%s306 + $0x520] sm:$0xff]
        %v558 = vld [vmem:[%s306 + $0x528] sm:$0xff]
        %v559 = vld [vmem:[%s306 + $0x530] sm:$0xff]
        %v560 = vld [vmem:[%s306 + $0x538] sm:$0xff]
        %v561 = vld [vmem:[%s306 + $0x540] sm:$0xff]
        %v562 = vld [vmem:[%s306 + $0x548] sm:$0xff]
        %v563 = vld [vmem:[%s306 + $0x550] sm:$0xff]
        %v564 = vld [vmem:[%s306 + $0x558] sm:$0xff]
        %v565 = vld [vmem:[%s306 + $0x560] sm:$0xff]
        %v566 = vld [vmem:[%s306 + $0x568] sm:$0xff]
        %v567 = vld [vmem:[%s306 + $0x570] sm:$0xff]
        %v568 = vld [vmem:[%s306 + $0x578] sm:$0xff]
        %v569 = vld [vmem:[%s306 + $0x580] sm:$0xff]
        %v570 = vld [vmem:[%s306 + $0x588] sm:$0xff]
        %v571 = vld [vmem:[%s306 + $0x590] sm:$0xff]
        %v572 = vld [vmem:[%s306 + $0x598] sm:$0xff]
        %v573 = vld [vmem:[%s306 + $0x5a0] sm:$0xff]
        %v574 = vld [vmem:[%s306 + $0x5a8] sm:$0xff]
        %v575 = vld [vmem:[%s306 + $0x5b0] sm:$0xff]
        %v576 = vld [vmem:[%s306 + $0x5b8] sm:$0xff]
        %v577 = vld [vmem:[%s306 + $0x5c0] sm:$0xff]
        %v578 = vld [vmem:[%s306 + $0x5c8] sm:$0xff]
        %v579 = vld [vmem:[%s306 + $0x5d0] sm:$0xff]
        %v580 = vld [vmem:[%s306 + $0x5d8] sm:$0xff]
        %v581 = vld [vmem:[%s306 + $0x5e0] sm:$0xff]
        %v582 = vld [vmem:[%s306 + $0x5e8] sm:$0xff]
        %v583 = vld [vmem:[%s306 + $0x5f0] sm:$0xff]
        %v584 = vld [vmem:[%s306 + $0x5f8] sm:$0xff]
        %v585 = vld [vmem:[%s306 + $0x600] sm:$0xff]
        %v586 = vld [vmem:[%s306 + $0x608] sm:$0xff]
        %v587 = vld [vmem:[%s306 + $0x610] sm:$0xff]
        %v588 = vld [vmem:[%s306 + $0x618] sm:$0xff]
        %v589 = vld [vmem:[%s306 + $0x620] sm:$0xff]
        %v590 = vld [vmem:[%s306 + $0x628] sm:$0xff]
        %v591 = vld [vmem:[%s306 + $0x630] sm:$0xff]
        %v592 = vld [vmem:[%s306 + $0x638] sm:$0xff]
        %v593 = vld [vmem:[%s306 + $0x640] sm:$0xff]
        %v594 = vld [vmem:[%s306 + $0x648] sm:$0xff]
        %v595 = vld [vmem:[%s306 + $0x650] sm:$0xff]
        %v596 = vld [vmem:[%s306 + $0x658] sm:$0xff]
        %v597 = vld [vmem:[%s306 + $0x660] sm:$0xff]
        %v598 = vld [vmem:[%s306 + $0x668] sm:$0xff]
        %v599 = vld [vmem:[%s306 + $0x670] sm:$0xff]
        %v600 = vld [vmem:[%s306 + $0x678] sm:$0xff]
        %v601 = vld [vmem:[%s306 + $0x680] sm:$0xff]
        %v602 = vld [vmem:[%s306 + $0x688] sm:$0xff]
        %v603 = vld [vmem:[%s306 + $0x690] sm:$0xff]
        %v604 = vld [vmem:[%s306 + $0x698] sm:$0xff]
        %v605 = vld [vmem:[%s306 + $0x6a0] sm:$0xff]
        %v606 = vld [vmem:[%s306 + $0x6a8] sm:$0xff]
        %v607 = vld [vmem:[%s306 + $0x6b0] sm:$0xff]
        %v608 = vld [vmem:[%s306 + $0x6b8] sm:$0xff]
        %v609 = vld [vmem:[%s306 + $0x6c0] sm:$0xff]
        %v610 = vld [vmem:[%s306 + $0x6c8] sm:$0xff]
        %v611 = vld [vmem:[%s306 + $0x6d0] sm:$0xff]
        %v612 = vld [vmem:[%s306 + $0x6d8] sm:$0xff]
        %v613 = vld [vmem:[%s306 + $0x6e0] sm:$0xff]
        %v614 = vld [vmem:[%s306 + $0x6e8] sm:$0xff]
        %v615 = vld [vmem:[%s306 + $0x6f0] sm:$0xff]
        %v616 = vld [vmem:[%s306 + $0x6f8] sm:$0xff]
        %v617 = vld [vmem:[%s306 + $0x700] sm:$0xff]
        %v618 = vld [vmem:[%s306 + $0x708] sm:$0xff]
        %v619 = vld [vmem:[%s306 + $0x710] sm:$0xff]
        %v620 = vld [vmem:[%s306 + $0x718] sm:$0xff]
        %v621 = vld [vmem:[%s306 + $0x720] sm:$0xff]
        %v622 = vld [vmem:[%s306 + $0x728] sm:$0xff]
        %v623 = vld [vmem:[%s306 + $0x730] sm:$0xff]
        %v624 = vld [vmem:[%s306 + $0x738] sm:$0xff]
        %v625 = vld [vmem:[%s306 + $0x740] sm:$0xff]
        %v626 = vld [vmem:[%s306 + $0x748] sm:$0xff]
        %v627 = vld [vmem:[%s306 + $0x750] sm:$0xff]
        %v628 = vld [vmem:[%s306 + $0x758] sm:$0xff]
        %v629 = vld [vmem:[%s306 + $0x760] sm:$0xff]
        %v630 = vld [vmem:[%s306 + $0x768] sm:$0xff]
        %v631 = vld [vmem:[%s306 + $0x770] sm:$0xff]
        %v632 = vld [vmem:[%s306 + $0x778] sm:$0xff]
        %v633 = vld [vmem:[%s306 + $0x780] sm:$0xff]
        %v634 = vld [vmem:[%s306 + $0x788] sm:$0xff]
        %v635 = vld [vmem:[%s306 + $0x790] sm:$0xff]
        %v636 = vld [vmem:[%s306 + $0x798] sm:$0xff]
        %v637 = vld [vmem:[%s306 + $0x7a0] sm:$0xff]
        %v638 = vld [vmem:[%s306 + $0x7a8] sm:$0xff]
        %v639 = vld [vmem:[%s306 + $0x7b0] sm:$0xff]
        %v640 = vld [vmem:[%s306 + $0x7b8] sm:$0xff]
        %v641 = vld [vmem:[%s306 + $0x7c0] sm:$0xff]
        %v642 = vld [vmem:[%s306 + $0x7c8] sm:$0xff]
        %v643 = vld [vmem:[%s306 + $0x7d0] sm:$0xff]
        %v644 = vld [vmem:[%s306 + $0x7d8] sm:$0xff]
        %v645 = vld [vmem:[%s306 + $0x7e0] sm:$0xff]
        %v646 = vld [vmem:[%s306 + $0x7e8] sm:$0xff]
        %v647 = vld [vmem:[%s306 + $0x7f0] sm:$0xff]
        %v648 = vld [vmem:[%s306 + $0x7f8] sm:$0xff]
        %v649 = vld [vmem:[%s306 + $0x800] sm:$0xff]
        %v650 = vld [vmem:[%s306 + $0x808] sm:$0xff]
        %v651 = vld [vmem:[%s306 + $0x810] sm:$0xff]
        %v652 = vld [vmem:[%s306 + $0x818] sm:$0xff]
        %v653 = vld [vmem:[%s306 + $0x820] sm:$0xff]
        %v654 = vld [vmem:[%s306 + $0x828] sm:$0xff]
        %v655 = vld [vmem:[%s306 + $0x830] sm:$0xff]
        %v656 = vld [vmem:[%s306 + $0x838] sm:$0xff]
        %v657 = vld [vmem:[%s306 + $0x840] sm:$0xff]
        %v658 = vld [vmem:[%s306 + $0x848] sm:$0xff]
        %v659 = vld [vmem:[%s306 + $0x850] sm:$0xff]
        %v660 = vld [vmem:[%s306 + $0x858] sm:$0xff]
        %v661 = vld [vmem:[%s306 + $0x860] sm:$0xff]
        %v662 = vld [vmem:[%s306 + $0x868] sm:$0xff]
        %v663 = vld [vmem:[%s306 + $0x870] sm:$0xff]
        %v664 = vld [vmem:[%s306 + $0x878] sm:$0xff]
        %v665 = vld [vmem:[%s306 + $0x880] sm:$0xff]
        %v666 = vld [vmem:[%s306 + $0x888] sm:$0xff]
        %v667 = vld [vmem:[%s306 + $0x890] sm:$0xff]
        %v668 = vld [vmem:[%s306 + $0x898] sm:$0xff]
        %v669 = vld [vmem:[%s306 + $0x8a0] sm:$0xff]
        %v670 = vld [vmem:[%s306 + $0x8a8] sm:$0xff]
        %v671 = vld [vmem:[%s306 + $0x8b0] sm:$0xff]
        %v672 = vld [vmem:[%s306 + $0x8b8] sm:$0xff]
        %v673 = vld [vmem:[%s306 + $0x8c0] sm:$0xff]
        %v674 = vld [vmem:[%s306 + $0x8c8] sm:$0xff]
        %v675 = vld [vmem:[%s306 + $0x8d0] sm:$0xff]
        %v676 = vld [vmem:[%s306 + $0x8d8] sm:$0xff]
        %v677 = vld [vmem:[%s306 + $0x8e0] sm:$0xff]
        %v678 = vld [vmem:[%s306 + $0x8e8] sm:$0xff]
        %v679 = vld [vmem:[%s306 + $0x8f0] sm:$0xff]
        %v680 = vld [vmem:[%s306 + $0x8f8] sm:$0xff]
        %v681 = vld [vmem:[%s306 + $0x900] sm:$0xff]
        %v682 = vld [vmem:[%s306 + $0x908] sm:$0xff]
        %v683 = vld [vmem:[%s306 + $0x910] sm:$0xff]
        %v684 = vld [vmem:[%s306 + $0x918] sm:$0xff]
        %v685 = vld [vmem:[%s306 + $0x920] sm:$0xff]
        %v686 = vld [vmem:[%s306 + $0x928] sm:$0xff]
        %v687 = vld [vmem:[%s306 + $0x930] sm:$0xff]
        %v688 = vld [vmem:[%s306 + $0x938] sm:$0xff]
        %v689 = vld [vmem:[%s306 + $0x940] sm:$0xff]
        %v690 = vld [vmem:[%s306 + $0x948] sm:$0xff]
        %v691 = vld [vmem:[%s306 + $0x950] sm:$0xff]
        %v692 = vld [vmem:[%s306 + $0x958] sm:$0xff]
        %v693 = vld [vmem:[%s306 + $0x960] sm:$0xff]
        %v694 = vld [vmem:[%s306 + $0x968] sm:$0xff]
        %v695 = vld [vmem:[%s306 + $0x970] sm:$0xff]
        %v696 = vld [vmem:[%s306 + $0x978] sm:$0xff]
        %v697 = vld [vmem:[%s306 + $0x980] sm:$0xff]
        %v698 = vld [vmem:[%s306 + $0x988] sm:$0xff]
        %v699 = vld [vmem:[%s306 + $0x990] sm:$0xff]
        %v700 = vld [vmem:[%s306 + $0x998] sm:$0xff]
        %v701 = vld [vmem:[%s306 + $0x9a0] sm:$0xff]
        %v702 = vld [vmem:[%s306 + $0x9a8] sm:$0xff]
        %v703 = vld [vmem:[%s306 + $0x9b0] sm:$0xff]
        %v704 = vld [vmem:[%s306 + $0x9b8] sm:$0xff]
        %v705 = vld [vmem:[%s306 + $0x9c0] sm:$0xff]
        %v706 = vld [vmem:[%s306 + $0x9c8] sm:$0xff]
        %v707 = vld [vmem:[%s306 + $0x9d0] sm:$0xff]
        %v708 = vld [vmem:[%s306 + $0x9d8] sm:$0xff]
        %v709 = vld [vmem:[%s306 + $0x9e0] sm:$0xff]
        %v710 = vld [vmem:[%s306 + $0x9e8] sm:$0xff]
        %v711 = vld [vmem:[%s306 + $0x9f0] sm:$0xff]
        %v712 = vld [vmem:[%s306 + $0x9f8] sm:$0xff]
        %v713 = vld [vmem:[%s306 + $0xa00] sm:$0xff]
        %v714 = vld [vmem:[%s306 + $0xa08] sm:$0xff]
        %v715 = vld [vmem:[%s306 + $0xa10] sm:$0xff]
        %v716 = vld [vmem:[%s306 + $0xa18] sm:$0xff]
        %v717 = vld [vmem:[%s306 + $0xa20] sm:$0xff]
        %v718 = vld [vmem:[%s306 + $0xa28] sm:$0xff]
        %v719 = vld [vmem:[%s306 + $0xa30] sm:$0xff]
        %v720 = vld [vmem:[%s306 + $0xa38] sm:$0xff]
        %v721 = vld [vmem:[%s306 + $0xa40] sm:$0xff]
        %v722 = vld [vmem:[%s306 + $0xa48] sm:$0xff]
        %v723 = vld [vmem:[%s306 + $0xa50] sm:$0xff]
        %v724 = vld [vmem:[%s306 + $0xa58] sm:$0xff]
        %v725 = vld [vmem:[%s306 + $0xa60] sm:$0xff]
        %v726 = vld [vmem:[%s306 + $0xa68] sm:$0xff]
        %v727 = vld [vmem:[%s306 + $0xa70] sm:$0xff]
        %v728 = vld [vmem:[%s306 + $0xa78] sm:$0xff]
        %v729 = vld [vmem:[%s306 + $0xa80] sm:$0xff]
        %v730 = vld [vmem:[%s306 + $0xa88] sm:$0xff]
        %v731 = vld [vmem:[%s306 + $0xa90] sm:$0xff]
        %v732 = vld [vmem:[%s306 + $0xa98] sm:$0xff]
        %v733 = vld [vmem:[%s306 + $0xaa0] sm:$0xff]
        %v734 = vld [vmem:[%s306 + $0xaa8] sm:$0xff]
        %v735 = vld [vmem:[%s306 + $0xab0] sm:$0xff]
        %v736 = vld [vmem:[%s306 + $0xab8] sm:$0xff]
        %v737 = vld [vmem:[%s306 + $0xac0] sm:$0xff]
        %v738 = vld [vmem:[%s306 + $0xac8] sm:$0xff]
        %v739 = vld [vmem:[%s306 + $0xad0] sm:$0xff]
        %v740 = vld [vmem:[%s306 + $0xad8] sm:$0xff]
        %v741 = vld [vmem:[%s306 + $0xae0] sm:$0xff]
        %v742 = vld [vmem:[%s306 + $0xae8] sm:$0xff]
        %v743 = vld [vmem:[%s306 + $0xaf0] sm:$0xff]
        %v744 = vld [vmem:[%s306 + $0xaf8] sm:$0xff]
        %v745 = vld [vmem:[%s306 + $0xb00] sm:$0xff]
        %v746 = vld [vmem:[%s306 + $0xb08] sm:$0xff]
        %v747 = vld [vmem:[%s306 + $0xb10] sm:$0xff]
        %v748 = vld [vmem:[%s306 + $0xb18] sm:$0xff]
        %v749 = vld [vmem:[%s306 + $0xb20] sm:$0xff]
        %v750 = vld [vmem:[%s306 + $0xb28] sm:$0xff]
        %v751 = vld [vmem:[%s306 + $0xb30] sm:$0xff]
        %v752 = vld [vmem:[%s306 + $0xb38] sm:$0xff]
        %v753 = vld [vmem:[%s306 + $0xb40] sm:$0xff]
        %v754 = vld [vmem:[%s306 + $0xb48] sm:$0xff]
        %v755 = vld [vmem:[%s306 + $0xb50] sm:$0xff]
        %v756 = vld [vmem:[%s306 + $0xb58] sm:$0xff]
        %v757 = vld [vmem:[%s306 + $0xb60] sm:$0xff]
        %v758 = vld [vmem:[%s306 + $0xb68] sm:$0xff]
        %v759 = vld [vmem:[%s306 + $0xb70] sm:$0xff]
        %v760 = vld [vmem:[%s306 + $0xb78] sm:$0xff]
        %v761 = vld [vmem:[%s306 + $0xb80] sm:$0xff]
        %v762 = vld [vmem:[%s306 + $0xb88] sm:$0xff]
        %v763 = vld [vmem:[%s306 + $0xb90] sm:$0xff]
        %v764 = vld [vmem:[%s306 + $0xb98] sm:$0xff]
        %v765 = vld [vmem:[%s306 + $0xba0] sm:$0xff]
        %v766 = vld [vmem:[%s306 + $0xba8] sm:$0xff]
        %v767 = vld [vmem:[%s306 + $0xbb0] sm:$0xff]
        %v768 = vld [vmem:[%s306 + $0xbb8] sm:$0xff]
        %v769 = vld [vmem:[%s306 + $0xbc0] sm:$0xff]
        %v770 = vld [vmem:[%s306 + $0xbc8] sm:$0xff]
        %v771 = vld [vmem:[%s306 + $0xbd0] sm:$0xff]
        %v772 = vld [vmem:[%s306 + $0xbd8] sm:$0xff]
        %v773 = vld [vmem:[%s306 + $0xbe0] sm:$0xff]
        %v774 = vld [vmem:[%s306 + $0xbe8] sm:$0xff]
        %v775 = vld [vmem:[%s306 + $0xbf0] sm:$0xff]
        %v776 = vld [vmem:[%s306 + $0xbf8] sm:$0xff]
        %v777 = vld [vmem:[%s315] sm:$0xf]
        %v779 = vlaneseq
        %v780 = vshrl.u32 %v779, 7
        %v781 = vsub.s32 0, %v780
        %v782 = vrot.slane %v777, %v781
        %v783 = vlaneseq
        %v784 = vshrl.u32 %v783, 7
        %v785 = vsub.s32 1, %v784
        %v786 = vrot.slane %v777, %v785
        %v787 = vlaneseq
        %v788 = vshrl.u32 %v787, 7
        %v789 = vsub.s32 2, %v788
        %v790 = vrot.slane %v777, %v789
        %v791 = vlaneseq
        %v792 = vshrl.u32 %v791, 7
        %v793 = vsub.s32 3, %v792
        %v794 = vrot.slane %v777, %v793
        %799 = vmatprep.subr.mxu0 %v454
        %800 = vmatpush1.msra.mxu0 %v453
        %801 = vmatprep.subr.mxu0 %v450
        %802 = vmatpush1.msra.mxu0 %v449
        %803 = vmatprep.subr.mxu0 %v446
        %804 = vmatpush1.msra.mxu0 %v445
        %805 = vmatprep.subr.mxu0 %v442
        %806 = vmatpush1.msra.mxu0 %v441
        %807 = vmatprep.subr.mxu0 %v438
        %808 = vmatpush1.msra.mxu0 %v437
        %809 = vmatprep.subr.mxu0 %v434
        %810 = vmatpush1.msra.mxu0 %v433
        %811 = vmatprep.subr.mxu0 %v430
        %812 = vmatpush1.msra.mxu0 %v429
        %813 = vmatprep.subr.mxu0 %v426
        %814 = vmatpush1.msra.mxu0 %v425
        %815 = vmatprep.subr.mxu0 %v422
        %816 = vmatpush1.msra.mxu0 %v421
        %817 = vmatprep.subr.mxu0 %v418
        %818 = vmatpush1.msra.mxu0 %v417
        %819 = vmatprep.subr.mxu0 %v414
        %820 = vmatpush1.msra.mxu0 %v413
        %821 = vmatprep.subr.mxu0 %v410
        %822 = vmatpush1.msra.mxu0 %v409
        %823 = vmatprep.subr.mxu0 %v406
        %824 = vmatpush1.msra.mxu0 %v405
        %825 = vmatprep.subr.mxu0 %v402
        %826 = vmatpush1.msra.mxu0 %v401
        %827 = vmatprep.subr.mxu0 %v398
        %828 = vmatpush1.msra.mxu0 %v397
        %829 = vmatprep.subr.mxu0 %v394
        %830 = vmatpush1.msra.mxu0 %v393
        %831 = vmatprep.subr.mxu0 %v518
        %832 = vmatpush2.msra.mxu0 %v517
        %833 = vmatprep.subr.mxu0 %v514
        %834 = vmatpush2.msra.mxu0 %v513
        %835 = vmatprep.subr.mxu0 %v510
        %836 = vmatpush2.msra.mxu0 %v509
        %837 = vmatprep.subr.mxu0 %v506
        %838 = vmatpush2.msra.mxu0 %v505
        %839 = vmatprep.subr.mxu0 %v502
        %840 = vmatpush2.msra.mxu0 %v501
        %841 = vmatprep.subr.mxu0 %v498
        %842 = vmatpush2.msra.mxu0 %v497
        %843 = vmatprep.subr.mxu0 %v494
        %844 = vmatpush2.msra.mxu0 %v493
        %845 = vmatprep.subr.mxu0 %v490
        %846 = vmatpush2.msra.mxu0 %v489
        %847 = vmatprep.subr.mxu0 %v486
        %848 = vmatpush2.msra.mxu0 %v485
        %849 = vmatprep.subr.mxu0 %v482
        %850 = vmatpush2.msra.mxu0 %v481
        %851 = vmatprep.subr.mxu0 %v478
        %852 = vmatpush2.msra.mxu0 %v477
        %853 = vmatprep.subr.mxu0 %v474
        %854 = vmatpush2.msra.mxu0 %v473
        %855 = vmatprep.subr.mxu0 %v470
        %856 = vmatpush2.msra.mxu0 %v469
        %857 = vmatprep.subr.mxu0 %v466
        %858 = vmatpush2.msra.mxu0 %v465
        %859 = vmatprep.subr.mxu0 %v462
        %860 = vmatpush2.msra.mxu0 %v461
        %861 = vmatprep.subr.mxu0 %v458
        %862 = vmatpush2.msra.mxu0 %v457
        %863 = vmatprep.mubr.f32.mxu0 %v382
        %864 = vmatmul.mubr.f32.gmra.mxu0 %v381
        %v865 = vpop.f32.mrf.mxu0
        %v866 = vadd.f32 %v782, %v865
        %v867 = vpop.f32.mrf.mxu0
        %v868 = vadd.f32 %v786, %v867
        %869 = vmatprep.mubr.f32.mxu0 %v388
        %870 = vmatmul.mubr.f32.gmra.mxu0 %v387
        %v871 = vpop.f32.mrf.mxu0
        %v872 = vadd.f32 %v782, %v871
        %v873 = vpop.f32.mrf.mxu0
        %v874 = vadd.f32 %v786, %v873
        %875 = vdwg.mxu0
        %876 = vmatprep.subr.mxu0 %v582
        %877 = vmatpush1.msra.mxu0 %v581
        %878 = vmatprep.subr.mxu0 %v578
        %879 = vmatpush1.msra.mxu0 %v577
        %880 = vmatprep.subr.mxu0 %v574
        %881 = vmatpush1.msra.mxu0 %v573
        %882 = vmatprep.subr.mxu0 %v570
        %883 = vmatpush1.msra.mxu0 %v569
        %884 = vmatprep.subr.mxu0 %v566
        %885 = vmatpush1.msra.mxu0 %v565
        %886 = vmatprep.subr.mxu0 %v562
        %887 = vmatpush1.msra.mxu0 %v561
        %888 = vmatprep.subr.mxu0 %v558
        %889 = vmatpush1.msra.mxu0 %v557
        %890 = vmatprep.subr.mxu0 %v554
        %891 = vmatpush1.msra.mxu0 %v553
        %892 = vmatprep.subr.mxu0 %v550
        %893 = vmatpush1.msra.mxu0 %v549
        %894 = vmatprep.subr.mxu0 %v546
        %895 = vmatpush1.msra.mxu0 %v545
        %896 = vmatprep.subr.mxu0 %v542
        %897 = vmatpush1.msra.mxu0 %v541
        %898 = vmatprep.subr.mxu0 %v538
        %899 = vmatpush1.msra.mxu0 %v537
        %900 = vmatprep.subr.mxu0 %v534
        %901 = vmatpush1.msra.mxu0 %v533
        %902 = vmatprep.subr.mxu0 %v530
        %903 = vmatpush1.msra.mxu0 %v529
        %904 = vmatprep.subr.mxu0 %v526
        %905 = vmatpush1.msra.mxu0 %v525
        %906 = vmatprep.subr.mxu0 %v522
        %907 = vmatpush1.msra.mxu0 %v521
        %908 = vmatprep.subr.mxu0 %v646
        %909 = vmatpush2.msra.mxu0 %v645
        %910 = vmatprep.subr.mxu0 %v642
        %911 = vmatpush2.msra.mxu0 %v641
        %912 = vmatprep.subr.mxu0 %v638
        %913 = vmatpush2.msra.mxu0 %v637
        %914 = vmatprep.subr.mxu0 %v634
        %915 = vmatpush2.msra.mxu0 %v633
        %916 = vmatprep.subr.mxu0 %v630
        %917 = vmatpush2.msra.mxu0 %v629
        %918 = vmatprep.subr.mxu0 %v626
        %919 = vmatpush2.msra.mxu0 %v625
        %920 = vmatprep.subr.mxu0 %v622
        %921 = vmatpush2.msra.mxu0 %v621
        %922 = vmatprep.subr.mxu0 %v618
        %923 = vmatpush2.msra.mxu0 %v617
        %924 = vmatprep.subr.mxu0 %v614
        %925 = vmatpush2.msra.mxu0 %v613
        %926 = vmatprep.subr.mxu0 %v610
        %927 = vmatpush2.msra.mxu0 %v609
        %928 = vmatprep.subr.mxu0 %v606
        %929 = vmatpush2.msra.mxu0 %v605
        %930 = vmatprep.subr.mxu0 %v602
        %931 = vmatpush2.msra.mxu0 %v601
        %932 = vmatprep.subr.mxu0 %v598
        %933 = vmatpush2.msra.mxu0 %v597
        %934 = vmatprep.subr.mxu0 %v594
        %935 = vmatpush2.msra.mxu0 %v593
        %936 = vmatprep.subr.mxu0 %v590
        %937 = vmatpush2.msra.mxu0 %v589
        %938 = vmatprep.subr.mxu0 %v586
        %939 = vmatpush2.msra.mxu0 %v585
        %940 = vmatprep.mubr.f32.mxu0 %v384
        %941 = vmatmul.mubr.f32.gmra.mxu0 %v383
        %v942 = vpop.f32.mrf.mxu0
        %v943 = vadd.f32 %v866, %v942
        %v944 = vpop.f32.mrf.mxu0
        %v945 = vadd.f32 %v868, %v944
        %946 = vmatprep.mubr.f32.mxu0 %v390
        %947 = vmatmul.mubr.f32.gmra.mxu0 %v389
        %v948 = vpop.f32.mrf.mxu0
        %v949 = vadd.f32 %v872, %v948
        %v950 = vpop.f32.mrf.mxu0
        %v951 = vadd.f32 %v874, %v950
        %952 = vdwg.mxu0
        %953 = vmatprep.subr.mxu0 %v710
        %954 = vmatpush1.msra.mxu0 %v709
        %955 = vmatprep.subr.mxu0 %v706
        %956 = vmatpush1.msra.mxu0 %v705
        %957 = vmatprep.subr.mxu0 %v702
        %958 = vmatpush1.msra.mxu0 %v701
        %959 = vmatprep.subr.mxu0 %v698
        %960 = vmatpush1.msra.mxu0 %v697
        %961 = vmatprep.subr.mxu0 %v694
        %962 = vmatpush1.msra.mxu0 %v693
        %963 = vmatprep.subr.mxu0 %v690
        %964 = vmatpush1.msra.mxu0 %v689
        %965 = vmatprep.subr.mxu0 %v686
        %966 = vmatpush1.msra.mxu0 %v685
        %967 = vmatprep.subr.mxu0 %v682
        %968 = vmatpush1.msra.mxu0 %v681
        %969 = vmatprep.subr.mxu0 %v678
        %970 = vmatpush1.msra.mxu0 %v677
        %971 = vmatprep.subr.mxu0 %v674
        %972 = vmatpush1.msra.mxu0 %v673
        %973 = vmatprep.subr.mxu0 %v670
        %974 = vmatpush1.msra.mxu0 %v669
        %975 = vmatprep.subr.mxu0 %v666
        %976 = vmatpush1.msra.mxu0 %v665
        %977 = vmatprep.subr.mxu0 %v662
        %978 = vmatpush1.msra.mxu0 %v661
        %979 = vmatprep.subr.mxu0 %v658
        %980 = vmatpush1.msra.mxu0 %v657
        %981 = vmatprep.subr.mxu0 %v654
        %982 = vmatpush1.msra.mxu0 %v653
        %983 = vmatprep.subr.mxu0 %v650
        %984 = vmatpush1.msra.mxu0 %v649
        %985 = vmatprep.subr.mxu0 %v774
        %986 = vmatpush2.msra.mxu0 %v773
        %987 = vmatprep.subr.mxu0 %v770
        %988 = vmatpush2.msra.mxu0 %v769
        %989 = vmatprep.subr.mxu0 %v766
        %990 = vmatpush2.msra.mxu0 %v765
        %991 = vmatprep.subr.mxu0 %v762
        %992 = vmatpush2.msra.mxu0 %v761
        %993 = vmatprep.subr.mxu0 %v758
        %994 = vmatpush2.msra.mxu0 %v757
        %995 = vmatprep.subr.mxu0 %v754
        %996 = vmatpush2.msra.mxu0 %v753
        %997 = vmatprep.subr.mxu0 %v750
        %998 = vmatpush2.msra.mxu0 %v749
        %999 = vmatprep.subr.mxu0 %v746
        %1000 = vmatpush2.msra.mxu0 %v745
        %1001 = vmatprep.subr.mxu0 %v742
        %1002 = vmatpush2.msra.mxu0 %v741
        %1003 = vmatprep.subr.mxu0 %v738
        %1004 = vmatpush2.msra.mxu0 %v737
        %1005 = vmatprep.subr.mxu0 %v734
        %1006 = vmatpush2.msra.mxu0 %v733
        %1007 = vmatprep.subr.mxu0 %v730
        %1008 = vmatpush2.msra.mxu0 %v729
        %1009 = vmatprep.subr.mxu0 %v726
        %1010 = vmatpush2.msra.mxu0 %v725
        %1011 = vmatprep.subr.mxu0 %v722
        %1012 = vmatpush2.msra.mxu0 %v721
        %1013 = vmatprep.subr.mxu0 %v718
        %1014 = vmatpush2.msra.mxu0 %v717
        %1015 = vmatprep.subr.mxu0 %v714
        %1016 = vmatpush2.msra.mxu0 %v713
        %1017 = vmatprep.mubr.f32.mxu0 %v386
        %1018 = vmatmul.mubr.f32.gmra.mxu0 %v385
        %v1019 = vpop.f32.mrf.mxu0
        %v1020 = vadd.f32 %v943, %v1019
        %v1021 = vpop.f32.mrf.mxu0
        %v1022 = vadd.f32 %v945, %v1021
        %1023 = vmatprep.mubr.f32.mxu0 %v392
        %1024 = vmatmul.mubr.f32.gmra.mxu0 %v391
        %v1025 = vpop.f32.mrf.mxu0
        %v1026 = vadd.f32 %v949, %v1025
        %v1027 = vpop.f32.mrf.mxu0
        %v1028 = vadd.f32 %v951, %v1027
        %1029 = vdwg.mxu0
        %1030 = vmatprep.subr.mxu0 %v456
        %1031 = vmatpush1.msra.mxu0 %v455
        %1032 = vmatprep.subr.mxu0 %v452
        %1033 = vmatpush1.msra.mxu0 %v451
        %1034 = vmatprep.subr.mxu0 %v448
        %1035 = vmatpush1.msra.mxu0 %v447
        %1036 = vmatprep.subr.mxu0 %v444
        %1037 = vmatpush1.msra.mxu0 %v443
        %1038 = vmatprep.subr.mxu0 %v440
        %1039 = vmatpush1.msra.mxu0 %v439
        %1040 = vmatprep.subr.mxu0 %v436
        %1041 = vmatpush1.msra.mxu0 %v435
        %1042 = vmatprep.subr.mxu0 %v432
        %1043 = vmatpush1.msra.mxu0 %v431
        %1044 = vmatprep.subr.mxu0 %v428
        %1045 = vmatpush1.msra.mxu0 %v427
        %1046 = vmatprep.subr.mxu0 %v424
        %1047 = vmatpush1.msra.mxu0 %v423
        %1048 = vmatprep.subr.mxu0 %v420
        %1049 = vmatpush1.msra.mxu0 %v419
        %1050 = vmatprep.subr.mxu0 %v416
        %1051 = vmatpush1.msra.mxu0 %v415
        %1052 = vmatprep.subr.mxu0 %v412
        %1053 = vmatpush1.msra.mxu0 %v411
        %1054 = vmatprep.subr.mxu0 %v408
        %1055 = vmatpush1.msra.mxu0 %v407
        %1056 = vmatprep.subr.mxu0 %v404
        %1057 = vmatpush1.msra.mxu0 %v403
        %1058 = vmatprep.subr.mxu0 %v400
        %1059 = vmatpush1.msra.mxu0 %v399
        %1060 = vmatprep.subr.mxu0 %v396
        %1061 = vmatpush1.msra.mxu0 %v395
        %1062 = vmatprep.subr.mxu0 %v520
        %1063 = vmatpush2.msra.mxu0 %v519
        %1064 = vmatprep.subr.mxu0 %v516
        %1065 = vmatpush2.msra.mxu0 %v515
        %1066 = vmatprep.subr.mxu0 %v512
        %1067 = vmatpush2.msra.mxu0 %v511
        %1068 = vmatprep.subr.mxu0 %v508
        %1069 = vmatpush2.msra.mxu0 %v507
        %1070 = vmatprep.subr.mxu0 %v504
        %1071 = vmatpush2.msra.mxu0 %v503
        %1072 = vmatprep.subr.mxu0 %v500
        %1073 = vmatpush2.msra.mxu0 %v499
        %1074 = vmatprep.subr.mxu0 %v496
        %1075 = vmatpush2.msra.mxu0 %v495
        %1076 = vmatprep.subr.mxu0 %v492
        %1077 = vmatpush2.msra.mxu0 %v491
        %1078 = vmatprep.subr.mxu0 %v488
        %1079 = vmatpush2.msra.mxu0 %v487
        %1080 = vmatprep.subr.mxu0 %v484
        %1081 = vmatpush2.msra.mxu0 %v483
        %1082 = vmatprep.subr.mxu0 %v480
        %1083 = vmatpush2.msra.mxu0 %v479
        %1084 = vmatprep.subr.mxu0 %v476
        %1085 = vmatpush2.msra.mxu0 %v475
        %1086 = vmatprep.subr.mxu0 %v472
        %1087 = vmatpush2.msra.mxu0 %v471
        %1088 = vmatprep.subr.mxu0 %v468
        %1089 = vmatpush2.msra.mxu0 %v467
        %1090 = vmatprep.subr.mxu0 %v464
        %1091 = vmatpush2.msra.mxu0 %v463
        %1092 = vmatprep.subr.mxu0 %v460
        %1093 = vmatpush2.msra.mxu0 %v459
        %1094 = vmatprep.mubr.f32.mxu0 %v382
        %1095 = vmatmul.mubr.f32.gmra.mxu0 %v381
        %v1096 = vpop.f32.mrf.mxu0
        %v1097 = vadd.f32 %v790, %v1096
        %v1098 = vpop.f32.mrf.mxu0
        %v1099 = vadd.f32 %v794, %v1098
        %1100 = vmatprep.mubr.f32.mxu0 %v388
        %1101 = vmatmul.mubr.f32.gmra.mxu0 %v387
        %v1102 = vpop.f32.mrf.mxu0
        %v1103 = vadd.f32 %v790, %v1102
        %v1104 = vpop.f32.mrf.mxu0
        %v1105 = vadd.f32 %v794, %v1104
        %1106 = vdwg.mxu0
        %1107 = vmatprep.subr.mxu0 %v584
        %1108 = vmatpush1.msra.mxu0 %v583
        %1109 = vmatprep.subr.mxu0 %v580
        %1110 = vmatpush1.msra.mxu0 %v579
        %1111 = vmatprep.subr.mxu0 %v576
        %1112 = vmatpush1.msra.mxu0 %v575
        %1113 = vmatprep.subr.mxu0 %v572
        %1114 = vmatpush1.msra.mxu0 %v571
        %1115 = vmatprep.subr.mxu0 %v568
        %1116 = vmatpush1.msra.mxu0 %v567
        %1117 = vmatprep.subr.mxu0 %v564
        %1118 = vmatpush1.msra.mxu0 %v563
        %1119 = vmatprep.subr.mxu0 %v560
        %1120 = vmatpush1.msra.mxu0 %v559
        %1121 = vmatprep.subr.mxu0 %v556
        %1122 = vmatpush1.msra.mxu0 %v555
        %1123 = vmatprep.subr.mxu0 %v552
        %1124 = vmatpush1.msra.mxu0 %v551
        %1125 = vmatprep.subr.mxu0 %v548
        %1126 = vmatpush1.msra.mxu0 %v547
        %1127 = vmatprep.subr.mxu0 %v544
        %1128 = vmatpush1.msra.mxu0 %v543
        %1129 = vmatprep.subr.mxu0 %v540
        %1130 = vmatpush1.msra.mxu0 %v539
        %1131 = vmatprep.subr.mxu0 %v536
        %1132 = vmatpush1.msra.mxu0 %v535
        %1133 = vmatprep.subr.mxu0 %v532
        %1134 = vmatpush1.msra.mxu0 %v531
        %1135 = vmatprep.subr.mxu0 %v528
        %1136 = vmatpush1.msra.mxu0 %v527
        %1137 = vmatprep.subr.mxu0 %v524
        %1138 = vmatpush1.msra.mxu0 %v523
        %1139 = vmatprep.subr.mxu0 %v648
        %1140 = vmatpush2.msra.mxu0 %v647
        %1141 = vmatprep.subr.mxu0 %v644
        %1142 = vmatpush2.msra.mxu0 %v643
        %1143 = vmatprep.subr.mxu0 %v640
        %1144 = vmatpush2.msra.mxu0 %v639
        %1145 = vmatprep.subr.mxu0 %v636
        %1146 = vmatpush2.msra.mxu0 %v635
        %1147 = vmatprep.subr.mxu0 %v632
        %1148 = vmatpush2.msra.mxu0 %v631
        %1149 = vmatprep.subr.mxu0 %v628
        %1150 = vmatpush2.msra.mxu0 %v627
        %1151 = vmatprep.subr.mxu0 %v624
        %1152 = vmatpush2.msra.mxu0 %v623
        %1153 = vmatprep.subr.mxu0 %v620
        %1154 = vmatpush2.msra.mxu0 %v619
        %1155 = vmatprep.subr.mxu0 %v616
        %1156 = vmatpush2.msra.mxu0 %v615
        %1157 = vmatprep.subr.mxu0 %v612
        %1158 = vmatpush2.msra.mxu0 %v611
        %1159 = vmatprep.subr.mxu0 %v608
        %1160 = vmatpush2.msra.mxu0 %v607
        %1161 = vmatprep.subr.mxu0 %v604
        %1162 = vmatpush2.msra.mxu0 %v603
        %1163 = vmatprep.subr.mxu0 %v600
        %1164 = vmatpush2.msra.mxu0 %v599
        %1165 = vmatprep.subr.mxu0 %v596
        %1166 = vmatpush2.msra.mxu0 %v595
        %1167 = vmatprep.subr.mxu0 %v592
        %1168 = vmatpush2.msra.mxu0 %v591
        %1169 = vmatprep.subr.mxu0 %v588
        %1170 = vmatpush2.msra.mxu0 %v587
        %1171 = vmatprep.mubr.f32.mxu0 %v384
        %1172 = vmatmul.mubr.f32.gmra.mxu0 %v383
        %v1173 = vpop.f32.mrf.mxu0
        %v1174 = vadd.f32 %v1097, %v1173
        %v1175 = vpop.f32.mrf.mxu0
        %v1176 = vadd.f32 %v1099, %v1175
        %1177 = vmatprep.mubr.f32.mxu0 %v390
        %1178 = vmatmul.mubr.f32.gmra.mxu0 %v389
        %v1179 = vpop.f32.mrf.mxu0
        %v1180 = vadd.f32 %v1103, %v1179
        %v1181 = vpop.f32.mrf.mxu0
        %v1182 = vadd.f32 %v1105, %v1181
        %1183 = vdwg.mxu0
        %1184 = vmatprep.subr.mxu0 %v712
        %1185 = vmatpush1.msra.mxu0 %v711
        %1186 = vmatprep.subr.mxu0 %v708
        %1187 = vmatpush1.msra.mxu0 %v707
        %1188 = vmatprep.subr.mxu0 %v704
        %1189 = vmatpush1.msra.mxu0 %v703
        %1190 = vmatprep.subr.mxu0 %v700
        %1191 = vmatpush1.msra.mxu0 %v699
        %1192 = vmatprep.subr.mxu0 %v696
        %1193 = vmatpush1.msra.mxu0 %v695
        %1194 = vmatprep.subr.mxu0 %v692
        %1195 = vmatpush1.msra.mxu0 %v691
        %1196 = vmatprep.subr.mxu0 %v688
        %1197 = vmatpush1.msra.mxu0 %v687
        %1198 = vmatprep.subr.mxu0 %v684
        %1199 = vmatpush1.msra.mxu0 %v683
        %1200 = vmatprep.subr.mxu0 %v680
        %1201 = vmatpush1.msra.mxu0 %v679
        %1202 = vmatprep.subr.mxu0 %v676
        %1203 = vmatpush1.msra.mxu0 %v675
        %1204 = vmatprep.subr.mxu0 %v672
        %1205 = vmatpush1.msra.mxu0 %v671
        %1206 = vmatprep.subr.mxu0 %v668
        %1207 = vmatpush1.msra.mxu0 %v667
        %1208 = vmatprep.subr.mxu0 %v664
        %1209 = vmatpush1.msra.mxu0 %v663
        %1210 = vmatprep.subr.mxu0 %v660
        %1211 = vmatpush1.msra.mxu0 %v659
        %1212 = vmatprep.subr.mxu0 %v656
        %1213 = vmatpush1.msra.mxu0 %v655
        %1214 = vmatprep.subr.mxu0 %v652
        %1215 = vmatpush1.msra.mxu0 %v651
        %1216 = vmatprep.subr.mxu0 %v776
        %1217 = vmatpush2.msra.mxu0 %v775
        %1218 = vmatprep.subr.mxu0 %v772
        %1219 = vmatpush2.msra.mxu0 %v771
        %1220 = vmatprep.subr.mxu0 %v768
        %1221 = vmatpush2.msra.mxu0 %v767
        %1222 = vmatprep.subr.mxu0 %v764
        %1223 = vmatpush2.msra.mxu0 %v763
        %1224 = vmatprep.subr.mxu0 %v760
        %1225 = vmatpush2.msra.mxu0 %v759
        %1226 = vmatprep.subr.mxu0 %v756
        %1227 = vmatpush2.msra.mxu0 %v755
        %1228 = vmatprep.subr.mxu0 %v752
        %1229 = vmatpush2.msra.mxu0 %v751
        %1230 = vmatprep.subr.mxu0 %v748
        %1231 = vmatpush2.msra.mxu0 %v747
        %1232 = vmatprep.subr.mxu0 %v744
        %1233 = vmatpush2.msra.mxu0 %v743
        %1234 = vmatprep.subr.mxu0 %v740
        %1235 = vmatpush2.msra.mxu0 %v739
        %1236 = vmatprep.subr.mxu0 %v736
        %1237 = vmatpush2.msra.mxu0 %v735
        %1238 = vmatprep.subr.mxu0 %v732
        %1239 = vmatpush2.msra.mxu0 %v731
        %1240 = vmatprep.subr.mxu0 %v728
        %1241 = vmatpush2.msra.mxu0 %v727
        %1242 = vmatprep.subr.mxu0 %v724
        %1243 = vmatpush2.msra.mxu0 %v723
        %1244 = vmatprep.subr.mxu0 %v720
        %1245 = vmatpush2.msra.mxu0 %v719
        %1246 = vmatprep.subr.mxu0 %v716
        %1247 = vmatpush2.msra.mxu0 %v715
        %1248 = vmatprep.mubr.f32.mxu0 %v386
        %1249 = vmatmul.mubr.f32.gmra.mxu0 %v385
        %v1250 = vpop.f32.mrf.mxu0
        %v1251 = vadd.f32 %v1174, %v1250
        %v1252 = vpop.f32.mrf.mxu0
        %v1253 = vadd.f32 %v1176, %v1252
        %1254 = vmatprep.mubr.f32.mxu0 %v392
        %1255 = vmatmul.mubr.f32.gmra.mxu0 %v391
        %v1256 = vpop.f32.mrf.mxu0
        %v1257 = vadd.f32 %v1180, %v1256
        %v1258 = vpop.f32.mrf.mxu0
        %v1259 = vadd.f32 %v1182, %v1258
        %1260 = vdwg.mxu0
        %v1261 = vmax.f32 %v1020, 0.0
        %v1262 = vmax.f32 %v1022, 0.0
        %v1263 = vmax.f32 %v1251, 0.0
        %v1264 = vmax.f32 %v1253, 0.0
        %v1265 = vmax.f32 %v1026, 0.0
        %v1266 = vmax.f32 %v1028, 0.0
        %v1267 = vmax.f32 %v1257, 0.0
        %v1268 = vmax.f32 %v1259, 0.0
        %v1269 = vld [vmem:[#allocation2] sm:$0xff]
        %v1270 = vld [vmem:[#allocation2 + $0x8] sm:$0xff]
        %v1271 = vld [vmem:[#allocation2 + $0x10] sm:$0xff]
        %v1272 = vld [vmem:[#allocation2 + $0x18] sm:$0xff]
        %v1273 = vld [vmem:[#allocation2 + $0x20] sm:$0xff]
        %v1274 = vld [vmem:[#allocation2 + $0x28] sm:$0xff]
        %v1275 = vld [vmem:[#allocation2 + $0x30] sm:$0xff]
        %v1276 = vld [vmem:[#allocation2 + $0x38] sm:$0xff]
        %v1277 = vld [vmem:[#allocation2 + $0x40] sm:$0xff]
        %v1278 = vld [vmem:[#allocation2 + $0x48] sm:$0xff]
        %v1279 = vld [vmem:[#allocation2 + $0x50] sm:$0xff]
        %v1280 = vld [vmem:[#allocation2 + $0x58] sm:$0xff]
        %v1281 = vld [vmem:[%s324] sm:$0xff]
        %v1282 = vld [vmem:[%s324 + $0x8] sm:$0xff]
        %v1283 = vld [vmem:[%s324 + $0x10] sm:$0xff]
        %v1284 = vld [vmem:[%s324 + $0x18] sm:$0xff]
        %v1285 = vld [vmem:[%s324 + $0x20] sm:$0xff]
        %v1286 = vld [vmem:[%s324 + $0x28] sm:$0xff]
        %v1287 = vld [vmem:[%s324 + $0x30] sm:$0xff]
        %v1288 = vld [vmem:[%s324 + $0x38] sm:$0xff]
        %v1289 = vld [vmem:[%s324 + $0x40] sm:$0xff]
        %v1290 = vld [vmem:[%s324 + $0x48] sm:$0xff]
        %v1291 = vld [vmem:[%s324 + $0x50] sm:$0xff]
        %v1292 = vld [vmem:[%s324 + $0x58] sm:$0xff]
        %v1293 = vld [vmem:[%s324 + $0x60] sm:$0xff]
        %v1294 = vld [vmem:[%s324 + $0x68] sm:$0xff]
        %v1295 = vld [vmem:[%s324 + $0x70] sm:$0xff]
        %v1296 = vld [vmem:[%s324 + $0x78] sm:$0xff]
        %v1297 = vld [vmem:[%s324 + $0x80] sm:$0xff]
        %v1298 = vld [vmem:[%s324 + $0x88] sm:$0xff]
        %v1299 = vld [vmem:[%s324 + $0x90] sm:$0xff]
        %v1300 = vld [vmem:[%s324 + $0x98] sm:$0xff]
        %v1301 = vld [vmem:[%s324 + $0xa0] sm:$0xff]
        %v1302 = vld [vmem:[%s324 + $0xa8] sm:$0xff]
        %v1303 = vld [vmem:[%s324 + $0xb0] sm:$0xff]
        %v1304 = vld [vmem:[%s324 + $0xb8] sm:$0xff]
        %v1305 = vld [vmem:[%s324 + $0xc0] sm:$0xff]
        %v1306 = vld [vmem:[%s324 + $0xc8] sm:$0xff]
        %v1307 = vld [vmem:[%s324 + $0xd0] sm:$0xff]
        %v1308 = vld [vmem:[%s324 + $0xd8] sm:$0xff]
        %v1309 = vld [vmem:[%s324 + $0xe0] sm:$0xff]
        %v1310 = vld [vmem:[%s324 + $0xe8] sm:$0xff]
        %v1311 = vld [vmem:[%s324 + $0xf0] sm:$0xff]
        %v1312 = vld [vmem:[%s324 + $0xf8] sm:$0xff]
        %v1313 = vld [vmem:[%s324 + $0x100] sm:$0xff]
        %v1314 = vld [vmem:[%s324 + $0x108] sm:$0xff]
        %v1315 = vld [vmem:[%s324 + $0x110] sm:$0xff]
        %v1316 = vld [vmem:[%s324 + $0x118] sm:$0xff]
        %v1317 = vld [vmem:[%s324 + $0x120] sm:$0xff]
        %v1318 = vld [vmem:[%s324 + $0x128] sm:$0xff]
        %v1319 = vld [vmem:[%s324 + $0x130] sm:$0xff]
        %v1320 = vld [vmem:[%s324 + $0x138] sm:$0xff]
        %v1321 = vld [vmem:[%s324 + $0x140] sm:$0xff]
        %v1322 = vld [vmem:[%s324 + $0x148] sm:$0xff]
        %v1323 = vld [vmem:[%s324 + $0x150] sm:$0xff]
        %v1324 = vld [vmem:[%s324 + $0x158] sm:$0xff]
        %v1325 = vld [vmem:[%s324 + $0x160] sm:$0xff]
        %v1326 = vld [vmem:[%s324 + $0x168] sm:$0xff]
        %v1327 = vld [vmem:[%s324 + $0x170] sm:$0xff]
        %v1328 = vld [vmem:[%s324 + $0x178] sm:$0xff]
        %v1329 = vld [vmem:[%s324 + $0x180] sm:$0xff]
        %v1330 = vld [vmem:[%s324 + $0x188] sm:$0xff]
        %v1331 = vld [vmem:[%s324 + $0x190] sm:$0xff]
        %v1332 = vld [vmem:[%s324 + $0x198] sm:$0xff]
        %v1333 = vld [vmem:[%s324 + $0x1a0] sm:$0xff]
        %v1334 = vld [vmem:[%s324 + $0x1a8] sm:$0xff]
        %v1335 = vld [vmem:[%s324 + $0x1b0] sm:$0xff]
        %v1336 = vld [vmem:[%s324 + $0x1b8] sm:$0xff]
        %v1337 = vld [vmem:[%s324 + $0x1c0] sm:$0xff]
        %v1338 = vld [vmem:[%s324 + $0x1c8] sm:$0xff]
        %v1339 = vld [vmem:[%s324 + $0x1d0] sm:$0xff]
        %v1340 = vld [vmem:[%s324 + $0x1d8] sm:$0xff]
        %v1341 = vld [vmem:[%s324 + $0x1e0] sm:$0xff]
        %v1342 = vld [vmem:[%s324 + $0x1e8] sm:$0xff]
        %v1343 = vld [vmem:[%s324 + $0x1f0] sm:$0xff]
        %v1344 = vld [vmem:[%s324 + $0x1f8] sm:$0xff]
        %v1345 = vld [vmem:[%s324 + $0x200] sm:$0xff]
        %v1346 = vld [vmem:[%s324 + $0x208] sm:$0xff]
        %v1347 = vld [vmem:[%s324 + $0x210] sm:$0xff]
        %v1348 = vld [vmem:[%s324 + $0x218] sm:$0xff]
        %v1349 = vld [vmem:[%s324 + $0x220] sm:$0xff]
        %v1350 = vld [vmem:[%s324 + $0x228] sm:$0xff]
        %v1351 = vld [vmem:[%s324 + $0x230] sm:$0xff]
        %v1352 = vld [vmem:[%s324 + $0x238] sm:$0xff]
        %v1353 = vld [vmem:[%s324 + $0x240] sm:$0xff]
        %v1354 = vld [vmem:[%s324 + $0x248] sm:$0xff]
        %v1355 = vld [vmem:[%s324 + $0x250] sm:$0xff]
        %v1356 = vld [vmem:[%s324 + $0x258] sm:$0xff]
        %v1357 = vld [vmem:[%s324 + $0x260] sm:$0xff]
        %v1358 = vld [vmem:[%s324 + $0x268] sm:$0xff]
        %v1359 = vld [vmem:[%s324 + $0x270] sm:$0xff]
        %v1360 = vld [vmem:[%s324 + $0x278] sm:$0xff]
        %v1361 = vld [vmem:[%s324 + $0x280] sm:$0xff]
        %v1362 = vld [vmem:[%s324 + $0x288] sm:$0xff]
        %v1363 = vld [vmem:[%s324 + $0x290] sm:$0xff]
        %v1364 = vld [vmem:[%s324 + $0x298] sm:$0xff]
        %v1365 = vld [vmem:[%s324 + $0x2a0] sm:$0xff]
        %v1366 = vld [vmem:[%s324 + $0x2a8] sm:$0xff]
        %v1367 = vld [vmem:[%s324 + $0x2b0] sm:$0xff]
        %v1368 = vld [vmem:[%s324 + $0x2b8] sm:$0xff]
        %v1369 = vld [vmem:[%s324 + $0x2c0] sm:$0xff]
        %v1370 = vld [vmem:[%s324 + $0x2c8] sm:$0xff]
        %v1371 = vld [vmem:[%s324 + $0x2d0] sm:$0xff]
        %v1372 = vld [vmem:[%s324 + $0x2d8] sm:$0xff]
        %v1373 = vld [vmem:[%s324 + $0x2e0] sm:$0xff]
        %v1374 = vld [vmem:[%s324 + $0x2e8] sm:$0xff]
        %v1375 = vld [vmem:[%s324 + $0x2f0] sm:$0xff]
        %v1376 = vld [vmem:[%s324 + $0x2f8] sm:$0xff]
        %v1377 = vld [vmem:[%s324 + $0x300] sm:$0xff]
        %v1378 = vld [vmem:[%s324 + $0x308] sm:$0xff]
        %v1379 = vld [vmem:[%s324 + $0x310] sm:$0xff]
        %v1380 = vld [vmem:[%s324 + $0x318] sm:$0xff]
        %v1381 = vld [vmem:[%s324 + $0x320] sm:$0xff]
        %v1382 = vld [vmem:[%s324 + $0x328] sm:$0xff]
        %v1383 = vld [vmem:[%s324 + $0x330] sm:$0xff]
        %v1384 = vld [vmem:[%s324 + $0x338] sm:$0xff]
        %v1385 = vld [vmem:[%s324 + $0x340] sm:$0xff]
        %v1386 = vld [vmem:[%s324 + $0x348] sm:$0xff]
        %v1387 = vld [vmem:[%s324 + $0x350] sm:$0xff]
        %v1388 = vld [vmem:[%s324 + $0x358] sm:$0xff]
        %v1389 = vld [vmem:[%s324 + $0x360] sm:$0xff]
        %v1390 = vld [vmem:[%s324 + $0x368] sm:$0xff]
        %v1391 = vld [vmem:[%s324 + $0x370] sm:$0xff]
        %v1392 = vld [vmem:[%s324 + $0x378] sm:$0xff]
        %v1393 = vld [vmem:[%s324 + $0x380] sm:$0xff]
        %v1394 = vld [vmem:[%s324 + $0x388] sm:$0xff]
        %v1395 = vld [vmem:[%s324 + $0x390] sm:$0xff]
        %v1396 = vld [vmem:[%s324 + $0x398] sm:$0xff]
        %v1397 = vld [vmem:[%s324 + $0x3a0] sm:$0xff]
        %v1398 = vld [vmem:[%s324 + $0x3a8] sm:$0xff]
        %v1399 = vld [vmem:[%s324 + $0x3b0] sm:$0xff]
        %v1400 = vld [vmem:[%s324 + $0x3b8] sm:$0xff]
        %v1401 = vld [vmem:[%s324 + $0x3c0] sm:$0xff]
        %v1402 = vld [vmem:[%s324 + $0x3c8] sm:$0xff]
        %v1403 = vld [vmem:[%s324 + $0x3d0] sm:$0xff]
        %v1404 = vld [vmem:[%s324 + $0x3d8] sm:$0xff]
        %v1405 = vld [vmem:[%s324 + $0x3e0] sm:$0xff]
        %v1406 = vld [vmem:[%s324 + $0x3e8] sm:$0xff]
        %v1407 = vld [vmem:[%s324 + $0x3f0] sm:$0xff]
        %v1408 = vld [vmem:[%s324 + $0x3f8] sm:$0xff]
        %v1409 = vld [vmem:[%s324 + $0x400] sm:$0xff]
        %v1410 = vld [vmem:[%s324 + $0x408] sm:$0xff]
        %v1411 = vld [vmem:[%s324 + $0x410] sm:$0xff]
        %v1412 = vld [vmem:[%s324 + $0x418] sm:$0xff]
        %v1413 = vld [vmem:[%s324 + $0x420] sm:$0xff]
        %v1414 = vld [vmem:[%s324 + $0x428] sm:$0xff]
        %v1415 = vld [vmem:[%s324 + $0x430] sm:$0xff]
        %v1416 = vld [vmem:[%s324 + $0x438] sm:$0xff]
        %v1417 = vld [vmem:[%s324 + $0x440] sm:$0xff]
        %v1418 = vld [vmem:[%s324 + $0x448] sm:$0xff]
        %v1419 = vld [vmem:[%s324 + $0x450] sm:$0xff]
        %v1420 = vld [vmem:[%s324 + $0x458] sm:$0xff]
        %v1421 = vld [vmem:[%s324 + $0x460] sm:$0xff]
        %v1422 = vld [vmem:[%s324 + $0x468] sm:$0xff]
        %v1423 = vld [vmem:[%s324 + $0x470] sm:$0xff]
        %v1424 = vld [vmem:[%s324 + $0x478] sm:$0xff]
        %v1425 = vld [vmem:[%s324 + $0x480] sm:$0xff]
        %v1426 = vld [vmem:[%s324 + $0x488] sm:$0xff]
        %v1427 = vld [vmem:[%s324 + $0x490] sm:$0xff]
        %v1428 = vld [vmem:[%s324 + $0x498] sm:$0xff]
        %v1429 = vld [vmem:[%s324 + $0x4a0] sm:$0xff]
        %v1430 = vld [vmem:[%s324 + $0x4a8] sm:$0xff]
        %v1431 = vld [vmem:[%s324 + $0x4b0] sm:$0xff]
        %v1432 = vld [vmem:[%s324 + $0x4b8] sm:$0xff]
        %v1433 = vld [vmem:[%s324 + $0x4c0] sm:$0xff]
        %v1434 = vld [vmem:[%s324 + $0x4c8] sm:$0xff]
        %v1435 = vld [vmem:[%s324 + $0x4d0] sm:$0xff]
        %v1436 = vld [vmem:[%s324 + $0x4d8] sm:$0xff]
        %v1437 = vld [vmem:[%s324 + $0x4e0] sm:$0xff]
        %v1438 = vld [vmem:[%s324 + $0x4e8] sm:$0xff]
        %v1439 = vld [vmem:[%s324 + $0x4f0] sm:$0xff]
        %v1440 = vld [vmem:[%s324 + $0x4f8] sm:$0xff]
        %v1441 = vld [vmem:[%s324 + $0x500] sm:$0xff]
        %v1442 = vld [vmem:[%s324 + $0x508] sm:$0xff]
        %v1443 = vld [vmem:[%s324 + $0x510] sm:$0xff]
        %v1444 = vld [vmem:[%s324 + $0x518] sm:$0xff]
        %v1445 = vld [vmem:[%s324 + $0x520] sm:$0xff]
        %v1446 = vld [vmem:[%s324 + $0x528] sm:$0xff]
        %v1447 = vld [vmem:[%s324 + $0x530] sm:$0xff]
        %v1448 = vld [vmem:[%s324 + $0x538] sm:$0xff]
        %v1449 = vld [vmem:[%s324 + $0x540] sm:$0xff]
        %v1450 = vld [vmem:[%s324 + $0x548] sm:$0xff]
        %v1451 = vld [vmem:[%s324 + $0x550] sm:$0xff]
        %v1452 = vld [vmem:[%s324 + $0x558] sm:$0xff]
        %v1453 = vld [vmem:[%s324 + $0x560] sm:$0xff]
        %v1454 = vld [vmem:[%s324 + $0x568] sm:$0xff]
        %v1455 = vld [vmem:[%s324 + $0x570] sm:$0xff]
        %v1456 = vld [vmem:[%s324 + $0x578] sm:$0xff]
        %v1457 = vld [vmem:[%s324 + $0x580] sm:$0xff]
        %v1458 = vld [vmem:[%s324 + $0x588] sm:$0xff]
        %v1459 = vld [vmem:[%s324 + $0x590] sm:$0xff]
        %v1460 = vld [vmem:[%s324 + $0x598] sm:$0xff]
        %v1461 = vld [vmem:[%s324 + $0x5a0] sm:$0xff]
        %v1462 = vld [vmem:[%s324 + $0x5a8] sm:$0xff]
        %v1463 = vld [vmem:[%s324 + $0x5b0] sm:$0xff]
        %v1464 = vld [vmem:[%s324 + $0x5b8] sm:$0xff]
        %v1465 = vld [vmem:[%s324 + $0x5c0] sm:$0xff]
        %v1466 = vld [vmem:[%s324 + $0x5c8] sm:$0xff]
        %v1467 = vld [vmem:[%s324 + $0x5d0] sm:$0xff]
        %v1468 = vld [vmem:[%s324 + $0x5d8] sm:$0xff]
        %v1469 = vld [vmem:[%s324 + $0x5e0] sm:$0xff]
        %v1470 = vld [vmem:[%s324 + $0x5e8] sm:$0xff]
        %v1471 = vld [vmem:[%s324 + $0x5f0] sm:$0xff]
        %v1472 = vld [vmem:[%s324 + $0x5f8] sm:$0xff]
        %v1473 = vld [vmem:[%s324 + $0x600] sm:$0xff]
        %v1474 = vld [vmem:[%s324 + $0x608] sm:$0xff]
        %v1475 = vld [vmem:[%s324 + $0x610] sm:$0xff]
        %v1476 = vld [vmem:[%s324 + $0x618] sm:$0xff]
        %v1477 = vld [vmem:[%s324 + $0x620] sm:$0xff]
        %v1478 = vld [vmem:[%s324 + $0x628] sm:$0xff]
        %v1479 = vld [vmem:[%s324 + $0x630] sm:$0xff]
        %v1480 = vld [vmem:[%s324 + $0x638] sm:$0xff]
        %v1481 = vld [vmem:[%s324 + $0x640] sm:$0xff]
        %v1482 = vld [vmem:[%s324 + $0x648] sm:$0xff]
        %v1483 = vld [vmem:[%s324 + $0x650] sm:$0xff]
        %v1484 = vld [vmem:[%s324 + $0x658] sm:$0xff]
        %v1485 = vld [vmem:[%s324 + $0x660] sm:$0xff]
        %v1486 = vld [vmem:[%s324 + $0x668] sm:$0xff]
        %v1487 = vld [vmem:[%s324 + $0x670] sm:$0xff]
        %v1488 = vld [vmem:[%s324 + $0x678] sm:$0xff]
        %v1489 = vld [vmem:[%s324 + $0x680] sm:$0xff]
        %v1490 = vld [vmem:[%s324 + $0x688] sm:$0xff]
        %v1491 = vld [vmem:[%s324 + $0x690] sm:$0xff]
        %v1492 = vld [vmem:[%s324 + $0x698] sm:$0xff]
        %v1493 = vld [vmem:[%s324 + $0x6a0] sm:$0xff]
        %v1494 = vld [vmem:[%s324 + $0x6a8] sm:$0xff]
        %v1495 = vld [vmem:[%s324 + $0x6b0] sm:$0xff]
        %v1496 = vld [vmem:[%s324 + $0x6b8] sm:$0xff]
        %v1497 = vld [vmem:[%s324 + $0x6c0] sm:$0xff]
        %v1498 = vld [vmem:[%s324 + $0x6c8] sm:$0xff]
        %v1499 = vld [vmem:[%s324 + $0x6d0] sm:$0xff]
        %v1500 = vld [vmem:[%s324 + $0x6d8] sm:$0xff]
        %v1501 = vld [vmem:[%s324 + $0x6e0] sm:$0xff]
        %v1502 = vld [vmem:[%s324 + $0x6e8] sm:$0xff]
        %v1503 = vld [vmem:[%s324 + $0x6f0] sm:$0xff]
        %v1504 = vld [vmem:[%s324 + $0x6f8] sm:$0xff]
        %v1505 = vld [vmem:[%s324 + $0x700] sm:$0xff]
        %v1506 = vld [vmem:[%s324 + $0x708] sm:$0xff]
        %v1507 = vld [vmem:[%s324 + $0x710] sm:$0xff]
        %v1508 = vld [vmem:[%s324 + $0x718] sm:$0xff]
        %v1509 = vld [vmem:[%s324 + $0x720] sm:$0xff]
        %v1510 = vld [vmem:[%s324 + $0x728] sm:$0xff]
        %v1511 = vld [vmem:[%s324 + $0x730] sm:$0xff]
        %v1512 = vld [vmem:[%s324 + $0x738] sm:$0xff]
        %v1513 = vld [vmem:[%s324 + $0x740] sm:$0xff]
        %v1514 = vld [vmem:[%s324 + $0x748] sm:$0xff]
        %v1515 = vld [vmem:[%s324 + $0x750] sm:$0xff]
        %v1516 = vld [vmem:[%s324 + $0x758] sm:$0xff]
        %v1517 = vld [vmem:[%s324 + $0x760] sm:$0xff]
        %v1518 = vld [vmem:[%s324 + $0x768] sm:$0xff]
        %v1519 = vld [vmem:[%s324 + $0x770] sm:$0xff]
        %v1520 = vld [vmem:[%s324 + $0x778] sm:$0xff]
        %v1521 = vld [vmem:[%s324 + $0x780] sm:$0xff]
        %v1522 = vld [vmem:[%s324 + $0x788] sm:$0xff]
        %v1523 = vld [vmem:[%s324 + $0x790] sm:$0xff]
        %v1524 = vld [vmem:[%s324 + $0x798] sm:$0xff]
        %v1525 = vld [vmem:[%s324 + $0x7a0] sm:$0xff]
        %v1526 = vld [vmem:[%s324 + $0x7a8] sm:$0xff]
        %v1527 = vld [vmem:[%s324 + $0x7b0] sm:$0xff]
        %v1528 = vld [vmem:[%s324 + $0x7b8] sm:$0xff]
        %v1529 = vld [vmem:[%s324 + $0x7c0] sm:$0xff]
        %v1530 = vld [vmem:[%s324 + $0x7c8] sm:$0xff]
        %v1531 = vld [vmem:[%s324 + $0x7d0] sm:$0xff]
        %v1532 = vld [vmem:[%s324 + $0x7d8] sm:$0xff]
        %v1533 = vld [vmem:[%s324 + $0x7e0] sm:$0xff]
        %v1534 = vld [vmem:[%s324 + $0x7e8] sm:$0xff]
        %v1535 = vld [vmem:[%s324 + $0x7f0] sm:$0xff]
        %v1536 = vld [vmem:[%s324 + $0x7f8] sm:$0xff]
        %v1537 = vld [vmem:[%s324 + $0x800] sm:$0xff]
        %v1538 = vld [vmem:[%s324 + $0x808] sm:$0xff]
        %v1539 = vld [vmem:[%s324 + $0x810] sm:$0xff]
        %v1540 = vld [vmem:[%s324 + $0x818] sm:$0xff]
        %v1541 = vld [vmem:[%s324 + $0x820] sm:$0xff]
        %v1542 = vld [vmem:[%s324 + $0x828] sm:$0xff]
        %v1543 = vld [vmem:[%s324 + $0x830] sm:$0xff]
        %v1544 = vld [vmem:[%s324 + $0x838] sm:$0xff]
        %v1545 = vld [vmem:[%s324 + $0x840] sm:$0xff]
        %v1546 = vld [vmem:[%s324 + $0x848] sm:$0xff]
        %v1547 = vld [vmem:[%s324 + $0x850] sm:$0xff]
        %v1548 = vld [vmem:[%s324 + $0x858] sm:$0xff]
        %v1549 = vld [vmem:[%s324 + $0x860] sm:$0xff]
        %v1550 = vld [vmem:[%s324 + $0x868] sm:$0xff]
        %v1551 = vld [vmem:[%s324 + $0x870] sm:$0xff]
        %v1552 = vld [vmem:[%s324 + $0x878] sm:$0xff]
        %v1553 = vld [vmem:[%s324 + $0x880] sm:$0xff]
        %v1554 = vld [vmem:[%s324 + $0x888] sm:$0xff]
        %v1555 = vld [vmem:[%s324 + $0x890] sm:$0xff]
        %v1556 = vld [vmem:[%s324 + $0x898] sm:$0xff]
        %v1557 = vld [vmem:[%s324 + $0x8a0] sm:$0xff]
        %v1558 = vld [vmem:[%s324 + $0x8a8] sm:$0xff]
        %v1559 = vld [vmem:[%s324 + $0x8b0] sm:$0xff]
        %v1560 = vld [vmem:[%s324 + $0x8b8] sm:$0xff]
        %v1561 = vld [vmem:[%s324 + $0x8c0] sm:$0xff]
        %v1562 = vld [vmem:[%s324 + $0x8c8] sm:$0xff]
        %v1563 = vld [vmem:[%s324 + $0x8d0] sm:$0xff]
        %v1564 = vld [vmem:[%s324 + $0x8d8] sm:$0xff]
        %v1565 = vld [vmem:[%s324 + $0x8e0] sm:$0xff]
        %v1566 = vld [vmem:[%s324 + $0x8e8] sm:$0xff]
        %v1567 = vld [vmem:[%s324 + $0x8f0] sm:$0xff]
        %v1568 = vld [vmem:[%s324 + $0x8f8] sm:$0xff]
        %v1569 = vld [vmem:[%s324 + $0x900] sm:$0xff]
        %v1570 = vld [vmem:[%s324 + $0x908] sm:$0xff]
        %v1571 = vld [vmem:[%s324 + $0x910] sm:$0xff]
        %v1572 = vld [vmem:[%s324 + $0x918] sm:$0xff]
        %v1573 = vld [vmem:[%s324 + $0x920] sm:$0xff]
        %v1574 = vld [vmem:[%s324 + $0x928] sm:$0xff]
        %v1575 = vld [vmem:[%s324 + $0x930] sm:$0xff]
        %v1576 = vld [vmem:[%s324 + $0x938] sm:$0xff]
        %v1577 = vld [vmem:[%s324 + $0x940] sm:$0xff]
        %v1578 = vld [vmem:[%s324 + $0x948] sm:$0xff]
        %v1579 = vld [vmem:[%s324 + $0x950] sm:$0xff]
        %v1580 = vld [vmem:[%s324 + $0x958] sm:$0xff]
        %v1581 = vld [vmem:[%s324 + $0x960] sm:$0xff]
        %v1582 = vld [vmem:[%s324 + $0x968] sm:$0xff]
        %v1583 = vld [vmem:[%s324 + $0x970] sm:$0xff]
        %v1584 = vld [vmem:[%s324 + $0x978] sm:$0xff]
        %v1585 = vld [vmem:[%s324 + $0x980] sm:$0xff]
        %v1586 = vld [vmem:[%s324 + $0x988] sm:$0xff]
        %v1587 = vld [vmem:[%s324 + $0x990] sm:$0xff]
        %v1588 = vld [vmem:[%s324 + $0x998] sm:$0xff]
        %v1589 = vld [vmem:[%s324 + $0x9a0] sm:$0xff]
        %v1590 = vld [vmem:[%s324 + $0x9a8] sm:$0xff]
        %v1591 = vld [vmem:[%s324 + $0x9b0] sm:$0xff]
        %v1592 = vld [vmem:[%s324 + $0x9b8] sm:$0xff]
        %v1593 = vld [vmem:[%s324 + $0x9c0] sm:$0xff]
        %v1594 = vld [vmem:[%s324 + $0x9c8] sm:$0xff]
        %v1595 = vld [vmem:[%s324 + $0x9d0] sm:$0xff]
        %v1596 = vld [vmem:[%s324 + $0x9d8] sm:$0xff]
        %v1597 = vld [vmem:[%s324 + $0x9e0] sm:$0xff]
        %v1598 = vld [vmem:[%s324 + $0x9e8] sm:$0xff]
        %v1599 = vld [vmem:[%s324 + $0x9f0] sm:$0xff]
        %v1600 = vld [vmem:[%s324 + $0x9f8] sm:$0xff]
        %v1601 = vld [vmem:[%s324 + $0xa00] sm:$0xff]
        %v1602 = vld [vmem:[%s324 + $0xa08] sm:$0xff]
        %v1603 = vld [vmem:[%s324 + $0xa10] sm:$0xff]
        %v1604 = vld [vmem:[%s324 + $0xa18] sm:$0xff]
        %v1605 = vld [vmem:[%s324 + $0xa20] sm:$0xff]
        %v1606 = vld [vmem:[%s324 + $0xa28] sm:$0xff]
        %v1607 = vld [vmem:[%s324 + $0xa30] sm:$0xff]
        %v1608 = vld [vmem:[%s324 + $0xa38] sm:$0xff]
        %v1609 = vld [vmem:[%s324 + $0xa40] sm:$0xff]
        %v1610 = vld [vmem:[%s324 + $0xa48] sm:$0xff]
        %v1611 = vld [vmem:[%s324 + $0xa50] sm:$0xff]
        %v1612 = vld [vmem:[%s324 + $0xa58] sm:$0xff]
        %v1613 = vld [vmem:[%s324 + $0xa60] sm:$0xff]
        %v1614 = vld [vmem:[%s324 + $0xa68] sm:$0xff]
        %v1615 = vld [vmem:[%s324 + $0xa70] sm:$0xff]
        %v1616 = vld [vmem:[%s324 + $0xa78] sm:$0xff]
        %v1617 = vld [vmem:[%s324 + $0xa80] sm:$0xff]
        %v1618 = vld [vmem:[%s324 + $0xa88] sm:$0xff]
        %v1619 = vld [vmem:[%s324 + $0xa90] sm:$0xff]
        %v1620 = vld [vmem:[%s324 + $0xa98] sm:$0xff]
        %v1621 = vld [vmem:[%s324 + $0xaa0] sm:$0xff]
        %v1622 = vld [vmem:[%s324 + $0xaa8] sm:$0xff]
        %v1623 = vld [vmem:[%s324 + $0xab0] sm:$0xff]
        %v1624 = vld [vmem:[%s324 + $0xab8] sm:$0xff]
        %v1625 = vld [vmem:[%s324 + $0xac0] sm:$0xff]
        %v1626 = vld [vmem:[%s324 + $0xac8] sm:$0xff]
        %v1627 = vld [vmem:[%s324 + $0xad0] sm:$0xff]
        %v1628 = vld [vmem:[%s324 + $0xad8] sm:$0xff]
        %v1629 = vld [vmem:[%s324 + $0xae0] sm:$0xff]
        %v1630 = vld [vmem:[%s324 + $0xae8] sm:$0xff]
        %v1631 = vld [vmem:[%s324 + $0xaf0] sm:$0xff]
        %v1632 = vld [vmem:[%s324 + $0xaf8] sm:$0xff]
        %v1633 = vld [vmem:[%s324 + $0xb00] sm:$0xff]
        %v1634 = vld [vmem:[%s324 + $0xb08] sm:$0xff]
        %v1635 = vld [vmem:[%s324 + $0xb10] sm:$0xff]
        %v1636 = vld [vmem:[%s324 + $0xb18] sm:$0xff]
        %v1637 = vld [vmem:[%s324 + $0xb20] sm:$0xff]
        %v1638 = vld [vmem:[%s324 + $0xb28] sm:$0xff]
        %v1639 = vld [vmem:[%s324 + $0xb30] sm:$0xff]
        %v1640 = vld [vmem:[%s324 + $0xb38] sm:$0xff]
        %v1641 = vld [vmem:[%s324 + $0xb40] sm:$0xff]
        %v1642 = vld [vmem:[%s324 + $0xb48] sm:$0xff]
        %v1643 = vld [vmem:[%s324 + $0xb50] sm:$0xff]
        %v1644 = vld [vmem:[%s324 + $0xb58] sm:$0xff]
        %v1645 = vld [vmem:[%s324 + $0xb60] sm:$0xff]
        %v1646 = vld [vmem:[%s324 + $0xb68] sm:$0xff]
        %v1647 = vld [vmem:[%s324 + $0xb70] sm:$0xff]
        %v1648 = vld [vmem:[%s324 + $0xb78] sm:$0xff]
        %v1649 = vld [vmem:[%s324 + $0xb80] sm:$0xff]
        %v1650 = vld [vmem:[%s324 + $0xb88] sm:$0xff]
        %v1651 = vld [vmem:[%s324 + $0xb90] sm:$0xff]
        %v1652 = vld [vmem:[%s324 + $0xb98] sm:$0xff]
        %v1653 = vld [vmem:[%s324 + $0xba0] sm:$0xff]
        %v1654 = vld [vmem:[%s324 + $0xba8] sm:$0xff]
        %v1655 = vld [vmem:[%s324 + $0xbb0] sm:$0xff]
        %v1656 = vld [vmem:[%s324 + $0xbb8] sm:$0xff]
        %v1657 = vld [vmem:[%s324 + $0xbc0] sm:$0xff]
        %v1658 = vld [vmem:[%s324 + $0xbc8] sm:$0xff]
        %v1659 = vld [vmem:[%s324 + $0xbd0] sm:$0xff]
        %v1660 = vld [vmem:[%s324 + $0xbd8] sm:$0xff]
        %v1661 = vld [vmem:[%s324 + $0xbe0] sm:$0xff]
        %v1662 = vld [vmem:[%s324 + $0xbe8] sm:$0xff]
        %v1663 = vld [vmem:[%s324 + $0xbf0] sm:$0xff]
        %v1664 = vld [vmem:[%s324 + $0xbf8] sm:$0xff]
        %1665 = vmatprep.subr.mxu0 %v1372
        %1666 = vmatpush1.msra.mxu0 %v1371
        %1667 = vmatprep.subr.mxu0 %v1366
        %1668 = vmatpush1.msra.mxu0 %v1365
        %1669 = vmatprep.subr.mxu0 %v1360
        %1670 = vmatpush1.msra.mxu0 %v1359
        %1671 = vmatprep.subr.mxu0 %v1354
        %1672 = vmatpush1.msra.mxu0 %v1353
        %1673 = vmatprep.subr.mxu0 %v1348
        %1674 = vmatpush1.msra.mxu0 %v1347
        %1675 = vmatprep.subr.mxu0 %v1342
        %1676 = vmatpush1.msra.mxu0 %v1341
        %1677 = vmatprep.subr.mxu0 %v1336
        %1678 = vmatpush1.msra.mxu0 %v1335
        %1679 = vmatprep.subr.mxu0 %v1330
        %1680 = vmatpush1.msra.mxu0 %v1329
        %1681 = vmatprep.subr.mxu0 %v1324
        %1682 = vmatpush1.msra.mxu0 %v1323
        %1683 = vmatprep.subr.mxu0 %v1318
        %1684 = vmatpush1.msra.mxu0 %v1317
        %1685 = vmatprep.subr.mxu0 %v1312
        %1686 = vmatpush1.msra.mxu0 %v1311
        %1687 = vmatprep.subr.mxu0 %v1306
        %1688 = vmatpush1.msra.mxu0 %v1305
        %1689 = vmatprep.subr.mxu0 %v1300
        %1690 = vmatpush1.msra.mxu0 %v1299
        %1691 = vmatprep.subr.mxu0 %v1294
        %1692 = vmatpush1.msra.mxu0 %v1293
        %1693 = vmatprep.subr.mxu0 %v1288
        %1694 = vmatpush1.msra.mxu0 %v1287
        %1695 = vmatprep.subr.mxu0 %v1282
        %1696 = vmatpush1.msra.mxu0 %v1281
        %1697 = vmatprep.subr.mxu0 %v1468
        %1698 = vmatpush2.msra.mxu0 %v1467
        %1699 = vmatprep.subr.mxu0 %v1462
        %1700 = vmatpush2.msra.mxu0 %v1461
        %1701 = vmatprep.subr.mxu0 %v1456
        %1702 = vmatpush2.msra.mxu0 %v1455
        %1703 = vmatprep.subr.mxu0 %v1450
        %1704 = vmatpush2.msra.mxu0 %v1449
        %1705 = vmatprep.subr.mxu0 %v1444
        %1706 = vmatpush2.msra.mxu0 %v1443
        %1707 = vmatprep.subr.mxu0 %v1438
        %1708 = vmatpush2.msra.mxu0 %v1437
        %1709 = vmatprep.subr.mxu0 %v1432
        %1710 = vmatpush2.msra.mxu0 %v1431
        %1711 = vmatprep.subr.mxu0 %v1426
        %1712 = vmatpush2.msra.mxu0 %v1425
        %1713 = vmatprep.subr.mxu0 %v1420
        %1714 = vmatpush2.msra.mxu0 %v1419
        %1715 = vmatprep.subr.mxu0 %v1414
        %1716 = vmatpush2.msra.mxu0 %v1413
        %1717 = vmatprep.subr.mxu0 %v1408
        %1718 = vmatpush2.msra.mxu0 %v1407
        %1719 = vmatprep.subr.mxu0 %v1402
        %1720 = vmatpush2.msra.mxu0 %v1401
        %1721 = vmatprep.subr.mxu0 %v1396
        %1722 = vmatpush2.msra.mxu0 %v1395
        %1723 = vmatprep.subr.mxu0 %v1390
        %1724 = vmatpush2.msra.mxu0 %v1389
        %1725 = vmatprep.subr.mxu0 %v1384
        %1726 = vmatpush2.msra.mxu0 %v1383
        %1727 = vmatprep.subr.mxu0 %v1378
        %1728 = vmatpush2.msra.mxu0 %v1377
        %1729 = vmatprep.mubr.f32.mxu0 %v1262
        %1730 = vmatmul.mubr.f32.gmra.mxu0 %v1261
        %v1731 = vpop.f32.mrf.mxu0
        %v1732 = vadd.f32 0.0, %v1731
        %v1733 = vpop.f32.mrf.mxu0
        %v1734 = vadd.f32 0.0, %v1733
        %1735 = vmatprep.mubr.f32.mxu0 %v1266
        %1736 = vmatmul.mubr.f32.gmra.mxu0 %v1265
        %v1737 = vpop.f32.mrf.mxu0
        %v1738 = vadd.f32 0.0, %v1737
        %v1739 = vpop.f32.mrf.mxu0
        %v1740 = vadd.f32 0.0, %v1739
        %1741 = vdwg.mxu0
        %1742 = vmatprep.subr.mxu0 %v1564
        %1743 = vmatpush1.msra.mxu0 %v1563
        %1744 = vmatprep.subr.mxu0 %v1558
        %1745 = vmatpush1.msra.mxu0 %v1557
        %1746 = vmatprep.subr.mxu0 %v1552
        %1747 = vmatpush1.msra.mxu0 %v1551
        %1748 = vmatprep.subr.mxu0 %v1546
        %1749 = vmatpush1.msra.mxu0 %v1545
        %1750 = vmatprep.subr.mxu0 %v1540
        %1751 = vmatpush1.msra.mxu0 %v1539
        %1752 = vmatprep.subr.mxu0 %v1534
        %1753 = vmatpush1.msra.mxu0 %v1533
        %1754 = vmatprep.subr.mxu0 %v1528
        %1755 = vmatpush1.msra.mxu0 %v1527
        %1756 = vmatprep.subr.mxu0 %v1522
        %1757 = vmatpush1.msra.mxu0 %v1521
        %1758 = vmatprep.subr.mxu0 %v1516
        %1759 = vmatpush1.msra.mxu0 %v1515
        %1760 = vmatprep.subr.mxu0 %v1510
        %1761 = vmatpush1.msra.mxu0 %v1509
        %1762 = vmatprep.subr.mxu0 %v1504
        %1763 = vmatpush1.msra.mxu0 %v1503
        %1764 = vmatprep.subr.mxu0 %v1498
        %1765 = vmatpush1.msra.mxu0 %v1497
        %1766 = vmatprep.subr.mxu0 %v1492
        %1767 = vmatpush1.msra.mxu0 %v1491
        %1768 = vmatprep.subr.mxu0 %v1486
        %1769 = vmatpush1.msra.mxu0 %v1485
        %1770 = vmatprep.subr.mxu0 %v1480
        %1771 = vmatpush1.msra.mxu0 %v1479
        %1772 = vmatprep.subr.mxu0 %v1474
        %1773 = vmatpush1.msra.mxu0 %v1473
        %1774 = vmatprep.subr.mxu0 %v1660
        %1775 = vmatpush2.msra.mxu0 %v1659
        %1776 = vmatprep.subr.mxu0 %v1654
        %1777 = vmatpush2.msra.mxu0 %v1653
        %1778 = vmatprep.subr.mxu0 %v1648
        %1779 = vmatpush2.msra.mxu0 %v1647
        %1780 = vmatprep.subr.mxu0 %v1642
        %1781 = vmatpush2.msra.mxu0 %v1641
        %1782 = vmatprep.subr.mxu0 %v1636
        %1783 = vmatpush2.msra.mxu0 %v1635
        %1784 = vmatprep.subr.mxu0 %v1630
        %1785 = vmatpush2.msra.mxu0 %v1629
        %1786 = vmatprep.subr.mxu0 %v1624
        %1787 = vmatpush2.msra.mxu0 %v1623
        %1788 = vmatprep.subr.mxu0 %v1618
        %1789 = vmatpush2.msra.mxu0 %v1617
        %1790 = vmatprep.subr.mxu0 %v1612
        %1791 = vmatpush2.msra.mxu0 %v1611
        %1792 = vmatprep.subr.mxu0 %v1606
        %1793 = vmatpush2.msra.mxu0 %v1605
        %1794 = vmatprep.subr.mxu0 %v1600
        %1795 = vmatpush2.msra.mxu0 %v1599
        %1796 = vmatprep.subr.mxu0 %v1594
        %1797 = vmatpush2.msra.mxu0 %v1593
        %1798 = vmatprep.subr.mxu0 %v1588
        %1799 = vmatpush2.msra.mxu0 %v1587
        %1800 = vmatprep.subr.mxu0 %v1582
        %1801 = vmatpush2.msra.mxu0 %v1581
        %1802 = vmatprep.subr.mxu0 %v1576
        %1803 = vmatpush2.msra.mxu0 %v1575
        %1804 = vmatprep.subr.mxu0 %v1570
        %1805 = vmatpush2.msra.mxu0 %v1569
        %1806 = vmatprep.mubr.f32.mxu0 %v1264
        %1807 = vmatmul.mubr.f32.gmra.mxu0 %v1263
        %v1808 = vpop.f32.mrf.mxu0
        %v1809 = vadd.f32 %v1732, %v1808
        %v1810 = vpop.f32.mrf.mxu0
        %v1811 = vadd.f32 %v1734, %v1810
        %1812 = vmatprep.mubr.f32.mxu0 %v1268
        %1813 = vmatmul.mubr.f32.gmra.mxu0 %v1267
        %v1814 = vpop.f32.mrf.mxu0
        %v1815 = vadd.f32 %v1738, %v1814
        %v1816 = vpop.f32.mrf.mxu0
        %v1817 = vadd.f32 %v1740, %v1816
        %1818 = vdwg.mxu0
        %1819 = vmatprep.subr.mxu0 %v1374
        %1820 = vmatpush1.msra.mxu0 %v1373
        %1821 = vmatprep.subr.mxu0 %v1368
        %1822 = vmatpush1.msra.mxu0 %v1367
        %1823 = vmatprep.subr.mxu0 %v1362
        %1824 = vmatpush1.msra.mxu0 %v1361
        %1825 = vmatprep.subr.mxu0 %v1356
        %1826 = vmatpush1.msra.mxu0 %v1355
        %1827 = vmatprep.subr.mxu0 %v1350
        %1828 = vmatpush1.msra.mxu0 %v1349
        %1829 = vmatprep.subr.mxu0 %v1344
        %1830 = vmatpush1.msra.mxu0 %v1343
        %1831 = vmatprep.subr.mxu0 %v1338
        %1832 = vmatpush1.msra.mxu0 %v1337
        %1833 = vmatprep.subr.mxu0 %v1332
        %1834 = vmatpush1.msra.mxu0 %v1331
        %1835 = vmatprep.subr.mxu0 %v1326
        %1836 = vmatpush1.msra.mxu0 %v1325
        %1837 = vmatprep.subr.mxu0 %v1320
        %1838 = vmatpush1.msra.mxu0 %v1319
        %1839 = vmatprep.subr.mxu0 %v1314
        %1840 = vmatpush1.msra.mxu0 %v1313
        %1841 = vmatprep.subr.mxu0 %v1308
        %1842 = vmatpush1.msra.mxu0 %v1307
        %1843 = vmatprep.subr.mxu0 %v1302
        %1844 = vmatpush1.msra.mxu0 %v1301
        %1845 = vmatprep.subr.mxu0 %v1296
        %1846 = vmatpush1.msra.mxu0 %v1295
        %1847 = vmatprep.subr.mxu0 %v1290
        %1848 = vmatpush1.msra.mxu0 %v1289
        %1849 = vmatprep.subr.mxu0 %v1284
        %1850 = vmatpush1.msra.mxu0 %v1283
        %1851 = vmatprep.subr.mxu0 %v1470
        %1852 = vmatpush2.msra.mxu0 %v1469
        %1853 = vmatprep.subr.mxu0 %v1464
        %1854 = vmatpush2.msra.mxu0 %v1463
        %1855 = vmatprep.subr.mxu0 %v1458
        %1856 = vmatpush2.msra.mxu0 %v1457
        %1857 = vmatprep.subr.mxu0 %v1452
        %1858 = vmatpush2.msra.mxu0 %v1451
        %1859 = vmatprep.subr.mxu0 %v1446
        %1860 = vmatpush2.msra.mxu0 %v1445
        %1861 = vmatprep.subr.mxu0 %v1440
        %1862 = vmatpush2.msra.mxu0 %v1439
        %1863 = vmatprep.subr.mxu0 %v1434
        %1864 = vmatpush2.msra.mxu0 %v1433
        %1865 = vmatprep.subr.mxu0 %v1428
        %1866 = vmatpush2.msra.mxu0 %v1427
        %1867 = vmatprep.subr.mxu0 %v1422
        %1868 = vmatpush2.msra.mxu0 %v1421
        %1869 = vmatprep.subr.mxu0 %v1416
        %1870 = vmatpush2.msra.mxu0 %v1415
        %1871 = vmatprep.subr.mxu0 %v1410
        %1872 = vmatpush2.msra.mxu0 %v1409
        %1873 = vmatprep.subr.mxu0 %v1404
        %1874 = vmatpush2.msra.mxu0 %v1403
        %1875 = vmatprep.subr.mxu0 %v1398
        %1876 = vmatpush2.msra.mxu0 %v1397
        %1877 = vmatprep.subr.mxu0 %v1392
        %1878 = vmatpush2.msra.mxu0 %v1391
        %1879 = vmatprep.subr.mxu0 %v1386
        %1880 = vmatpush2.msra.mxu0 %v1385
        %1881 = vmatprep.subr.mxu0 %v1380
        %1882 = vmatpush2.msra.mxu0 %v1379
        %1883 = vmatprep.mubr.f32.mxu0 %v1262
        %1884 = vmatmul.mubr.f32.gmra.mxu0 %v1261
        %v1885 = vpop.f32.mrf.mxu0
        %v1886 = vadd.f32 0.0, %v1885
        %v1887 = vpop.f32.mrf.mxu0
        %v1888 = vadd.f32 0.0, %v1887
        %1889 = vmatprep.mubr.f32.mxu0 %v1266
        %1890 = vmatmul.mubr.f32.gmra.mxu0 %v1265
        %v1891 = vpop.f32.mrf.mxu0
        %v1892 = vadd.f32 0.0, %v1891
        %v1893 = vpop.f32.mrf.mxu0
        %v1894 = vadd.f32 0.0, %v1893
        %1895 = vdwg.mxu0
        %1896 = vmatprep.subr.mxu0 %v1566
        %1897 = vmatpush1.msra.mxu0 %v1565
        %1898 = vmatprep.subr.mxu0 %v1560
        %1899 = vmatpush1.msra.mxu0 %v1559
        %1900 = vmatprep.subr.mxu0 %v1554
        %1901 = vmatpush1.msra.mxu0 %v1553
        %1902 = vmatprep.subr.mxu0 %v1548
        %1903 = vmatpush1.msra.mxu0 %v1547
        %1904 = vmatprep.subr.mxu0 %v1542
        %1905 = vmatpush1.msra.mxu0 %v1541
        %1906 = vmatprep.subr.mxu0 %v1536
        %1907 = vmatpush1.msra.mxu0 %v1535
        %1908 = vmatprep.subr.mxu0 %v1530
        %1909 = vmatpush1.msra.mxu0 %v1529
        %1910 = vmatprep.subr.mxu0 %v1524
        %1911 = vmatpush1.msra.mxu0 %v1523
        %1912 = vmatprep.subr.mxu0 %v1518
        %1913 = vmatpush1.msra.mxu0 %v1517
        %1914 = vmatprep.subr.mxu0 %v1512
        %1915 = vmatpush1.msra.mxu0 %v1511
        %1916 = vmatprep.subr.mxu0 %v1506
        %1917 = vmatpush1.msra.mxu0 %v1505
        %1918 = vmatprep.subr.mxu0 %v1500
        %1919 = vmatpush1.msra.mxu0 %v1499
        %1920 = vmatprep.subr.mxu0 %v1494
        %1921 = vmatpush1.msra.mxu0 %v1493
        %1922 = vmatprep.subr.mxu0 %v1488
        %1923 = vmatpush1.msra.mxu0 %v1487
        %1924 = vmatprep.subr.mxu0 %v1482
        %1925 = vmatpush1.msra.mxu0 %v1481
        %1926 = vmatprep.subr.mxu0 %v1476
        %1927 = vmatpush1.msra.mxu0 %v1475
        %1928 = vmatprep.subr.mxu0 %v1662
        %1929 = vmatpush2.msra.mxu0 %v1661
        %1930 = vmatprep.subr.mxu0 %v1656
        %1931 = vmatpush2.msra.mxu0 %v1655
        %1932 = vmatprep.subr.mxu0 %v1650
        %1933 = vmatpush2.msra.mxu0 %v1649
        %1934 = vmatprep.subr.mxu0 %v1644
        %1935 = vmatpush2.msra.mxu0 %v1643
        %1936 = vmatprep.subr.mxu0 %v1638
        %1937 = vmatpush2.msra.mxu0 %v1637
        %1938 = vmatprep.subr.mxu0 %v1632
        %1939 = vmatpush2.msra.mxu0 %v1631
        %1940 = vmatprep.subr.mxu0 %v1626
        %1941 = vmatpush2.msra.mxu0 %v1625
        %1942 = vmatprep.subr.mxu0 %v1620
        %1943 = vmatpush2.msra.mxu0 %v1619
        %1944 = vmatprep.subr.mxu0 %v1614
        %1945 = vmatpush2.msra.mxu0 %v1613
        %1946 = vmatprep.subr.mxu0 %v1608
        %1947 = vmatpush2.msra.mxu0 %v1607
        %1948 = vmatprep.subr.mxu0 %v1602
        %1949 = vmatpush2.msra.mxu0 %v1601
        %1950 = vmatprep.subr.mxu0 %v1596
        %1951 = vmatpush2.msra.mxu0 %v1595
        %1952 = vmatprep.subr.mxu0 %v1590
        %1953 = vmatpush2.msra.mxu0 %v1589
        %1954 = vmatprep.subr.mxu0 %v1584
        %1955 = vmatpush2.msra.mxu0 %v1583
        %1956 = vmatprep.subr.mxu0 %v1578
        %1957 = vmatpush2.msra.mxu0 %v1577
        %1958 = vmatprep.subr.mxu0 %v1572
        %1959 = vmatpush2.msra.mxu0 %v1571
        %1960 = vmatprep.mubr.f32.mxu0 %v1264
        %1961 = vmatmul.mubr.f32.gmra.mxu0 %v1263
        %v1962 = vpop.f32.mrf.mxu0
        %v1963 = vadd.f32 %v1886, %v1962
        %v1964 = vpop.f32.mrf.mxu0
        %v1965 = vadd.f32 %v1888, %v1964
        %1966 = vmatprep.mubr.f32.mxu0 %v1268
        %1967 = vmatmul.mubr.f32.gmra.mxu0 %v1267
        %v1968 = vpop.f32.mrf.mxu0
        %v1969 = vadd.f32 %v1892, %v1968
        %v1970 = vpop.f32.mrf.mxu0
        %v1971 = vadd.f32 %v1894, %v1970
        %1972 = vdwg.mxu0
        %1973 = vmatprep.subr.mxu0 %v1376
        %1974 = vmatpush1.msra.mxu0 %v1375
        %1975 = vmatprep.subr.mxu0 %v1370
        %1976 = vmatpush1.msra.mxu0 %v1369
        %1977 = vmatprep.subr.mxu0 %v1364
        %1978 = vmatpush1.msra.mxu0 %v1363
        %1979 = vmatprep.subr.mxu0 %v1358
        %1980 = vmatpush1.msra.mxu0 %v1357
        %1981 = vmatprep.subr.mxu0 %v1352
        %1982 = vmatpush1.msra.mxu0 %v1351
        %1983 = vmatprep.subr.mxu0 %v1346
        %1984 = vmatpush1.msra.mxu0 %v1345
        %1985 = vmatprep.subr.mxu0 %v1340
        %1986 = vmatpush1.msra.mxu0 %v1339
        %1987 = vmatprep.subr.mxu0 %v1334
        %1988 = vmatpush1.msra.mxu0 %v1333
        %1989 = vmatprep.subr.mxu0 %v1328
        %1990 = vmatpush1.msra.mxu0 %v1327
        %1991 = vmatprep.subr.mxu0 %v1322
        %1992 = vmatpush1.msra.mxu0 %v1321
        %1993 = vmatprep.subr.mxu0 %v1316
        %1994 = vmatpush1.msra.mxu0 %v1315
        %1995 = vmatprep.subr.mxu0 %v1310
        %1996 = vmatpush1.msra.mxu0 %v1309
        %1997 = vmatprep.subr.mxu0 %v1304
        %1998 = vmatpush1.msra.mxu0 %v1303
        %1999 = vmatprep.subr.mxu0 %v1298
        %2000 = vmatpush1.msra.mxu0 %v1297
        %2001 = vmatprep.subr.mxu0 %v1292
        %2002 = vmatpush1.msra.mxu0 %v1291
        %2003 = vmatprep.subr.mxu0 %v1286
        %2004 = vmatpush1.msra.mxu0 %v1285
        %2005 = vmatprep.subr.mxu0 %v1472
        %2006 = vmatpush2.msra.mxu0 %v1471
        %2007 = vmatprep.subr.mxu0 %v1466
        %2008 = vmatpush2.msra.mxu0 %v1465
        %2009 = vmatprep.subr.mxu0 %v1460
        %2010 = vmatpush2.msra.mxu0 %v1459
        %2011 = vmatprep.subr.mxu0 %v1454
        %2012 = vmatpush2.msra.mxu0 %v1453
        %2013 = vmatprep.subr.mxu0 %v1448
        %2014 = vmatpush2.msra.mxu0 %v1447
        %2015 = vmatprep.subr.mxu0 %v1442
        %2016 = vmatpush2.msra.mxu0 %v1441
        %2017 = vmatprep.subr.mxu0 %v1436
        %2018 = vmatpush2.msra.mxu0 %v1435
        %2019 = vmatprep.subr.mxu0 %v1430
        %2020 = vmatpush2.msra.mxu0 %v1429
        %2021 = vmatprep.subr.mxu0 %v1424
        %2022 = vmatpush2.msra.mxu0 %v1423
        %2023 = vmatprep.subr.mxu0 %v1418
        %2024 = vmatpush2.msra.mxu0 %v1417
        %2025 = vmatprep.subr.mxu0 %v1412
        %2026 = vmatpush2.msra.mxu0 %v1411
        %2027 = vmatprep.subr.mxu0 %v1406
        %2028 = vmatpush2.msra.mxu0 %v1405
        %2029 = vmatprep.subr.mxu0 %v1400
        %2030 = vmatpush2.msra.mxu0 %v1399
        %2031 = vmatprep.subr.mxu0 %v1394
        %2032 = vmatpush2.msra.mxu0 %v1393
        %2033 = vmatprep.subr.mxu0 %v1388
        %2034 = vmatpush2.msra.mxu0 %v1387
        %2035 = vmatprep.subr.mxu0 %v1382
        %2036 = vmatpush2.msra.mxu0 %v1381
        %2037 = vmatprep.mubr.f32.mxu0 %v1262
        %2038 = vmatmul.mubr.f32.gmra.mxu0 %v1261
        %v2039 = vpop.f32.mrf.mxu0
        %v2040 = vadd.f32 0.0, %v2039
        %v2041 = vpop.f32.mrf.mxu0
        %v2042 = vadd.f32 0.0, %v2041
        %2043 = vmatprep.mubr.f32.mxu0 %v1266
        %2044 = vmatmul.mubr.f32.gmra.mxu0 %v1265
        %v2045 = vpop.f32.mrf.mxu0
        %v2046 = vadd.f32 0.0, %v2045
        %v2047 = vpop.f32.mrf.mxu0
        %v2048 = vadd.f32 0.0, %v2047
        %2049 = vdwg.mxu0
        %2050 = vmatprep.subr.mxu0 %v1568
        %2051 = vmatpush1.msra.mxu0 %v1567
        %2052 = vmatprep.subr.mxu0 %v1562
        %2053 = vmatpush1.msra.mxu0 %v1561
        %2054 = vmatprep.subr.mxu0 %v1556
        %2055 = vmatpush1.msra.mxu0 %v1555
        %2056 = vmatprep.subr.mxu0 %v1550
        %2057 = vmatpush1.msra.mxu0 %v1549
        %2058 = vmatprep.subr.mxu0 %v1544
        %2059 = vmatpush1.msra.mxu0 %v1543
        %2060 = vmatprep.subr.mxu0 %v1538
        %2061 = vmatpush1.msra.mxu0 %v1537
        %2062 = vmatprep.subr.mxu0 %v1532
        %2063 = vmatpush1.msra.mxu0 %v1531
        %2064 = vmatprep.subr.mxu0 %v1526
        %2065 = vmatpush1.msra.mxu0 %v1525
        %2066 = vmatprep.subr.mxu0 %v1520
        %2067 = vmatpush1.msra.mxu0 %v1519
        %2068 = vmatprep.subr.mxu0 %v1514
        %2069 = vmatpush1.msra.mxu0 %v1513
        %2070 = vmatprep.subr.mxu0 %v1508
        %2071 = vmatpush1.msra.mxu0 %v1507
        %2072 = vmatprep.subr.mxu0 %v1502
        %2073 = vmatpush1.msra.mxu0 %v1501
        %2074 = vmatprep.subr.mxu0 %v1496
        %2075 = vmatpush1.msra.mxu0 %v1495
        %2076 = vmatprep.subr.mxu0 %v1490
        %2077 = vmatpush1.msra.mxu0 %v1489
        %2078 = vmatprep.subr.mxu0 %v1484
        %2079 = vmatpush1.msra.mxu0 %v1483
        %2080 = vmatprep.subr.mxu0 %v1478
        %2081 = vmatpush1.msra.mxu0 %v1477
        %2082 = vmatprep.subr.mxu0 %v1664
        %2083 = vmatpush2.msra.mxu0 %v1663
        %2084 = vmatprep.subr.mxu0 %v1658
        %2085 = vmatpush2.msra.mxu0 %v1657
        %2086 = vmatprep.subr.mxu0 %v1652
        %2087 = vmatpush2.msra.mxu0 %v1651
        %2088 = vmatprep.subr.mxu0 %v1646
        %2089 = vmatpush2.msra.mxu0 %v1645
        %2090 = vmatprep.subr.mxu0 %v1640
        %2091 = vmatpush2.msra.mxu0 %v1639
        %2092 = vmatprep.subr.mxu0 %v1634
        %2093 = vmatpush2.msra.mxu0 %v1633
        %2094 = vmatprep.subr.mxu0 %v1628
        %2095 = vmatpush2.msra.mxu0 %v1627
        %2096 = vmatprep.subr.mxu0 %v1622
        %2097 = vmatpush2.msra.mxu0 %v1621
        %2098 = vmatprep.subr.mxu0 %v1616
        %2099 = vmatpush2.msra.mxu0 %v1615
        %2100 = vmatprep.subr.mxu0 %v1610
        %2101 = vmatpush2.msra.mxu0 %v1609
        %2102 = vmatprep.subr.mxu0 %v1604
        %2103 = vmatpush2.msra.mxu0 %v1603
        %2104 = vmatprep.subr.mxu0 %v1598
        %2105 = vmatpush2.msra.mxu0 %v1597
        %2106 = vmatprep.subr.mxu0 %v1592
        %2107 = vmatpush2.msra.mxu0 %v1591
        %2108 = vmatprep.subr.mxu0 %v1586
        %2109 = vmatpush2.msra.mxu0 %v1585
        %2110 = vmatprep.subr.mxu0 %v1580
        %2111 = vmatpush2.msra.mxu0 %v1579
        %2112 = vmatprep.subr.mxu0 %v1574
        %2113 = vmatpush2.msra.mxu0 %v1573
        %2114 = vmatprep.mubr.f32.mxu0 %v1264
        %2115 = vmatmul.mubr.f32.gmra.mxu0 %v1263
        %v2116 = vpop.f32.mrf.mxu0
        %v2117 = vadd.f32 %v2040, %v2116
        %v2118 = vpop.f32.mrf.mxu0
        %v2119 = vadd.f32 %v2042, %v2118
        %2120 = vmatprep.mubr.f32.mxu0 %v1268
        %2121 = vmatmul.mubr.f32.gmra.mxu0 %v1267
        %v2122 = vpop.f32.mrf.mxu0
        %v2123 = vadd.f32 %v2046, %v2122
        %v2124 = vpop.f32.mrf.mxu0
        %v2125 = vadd.f32 %v2048, %v2124
        %2126 = vdwg.mxu0
        %v2127 = vadd.f32 %v1269, %v1809
        %v2128 = vadd.f32 %v1270, %v1811
        %v2129 = vadd.f32 %v1271, %v1963
        %v2130 = vadd.f32 %v1272, %v1965
        %v2131 = vadd.f32 %v1273, %v2117
        %v2132 = vadd.f32 %v1274, %v2119
        %v2133 = vadd.f32 %v1275, %v1815
        %v2134 = vadd.f32 %v1276, %v1817
        %v2135 = vadd.f32 %v1277, %v1969
        %v2136 = vadd.f32 %v1278, %v1971
        %v2137 = vadd.f32 %v1279, %v2123
        %v2138 = vadd.f32 %v1280, %v2125
        %2139 = vst [vmem:[#allocation2] sm:$0xff] %v2127
        %2140 = vst [vmem:[#allocation2 + $0x8] sm:$0xff] %v2128
        %2141 = vst [vmem:[#allocation2 + $0x10] sm:$0xff] %v2129
        %2142 = vst [vmem:[#allocation2 + $0x18] sm:$0xff] %v2130
        %2143 = vst [vmem:[#allocation2 + $0x20] sm:$0xff] %v2131
        %2144 = vst [vmem:[#allocation2 + $0x28] sm:$0xff] %v2132
        %2145 = vst [vmem:[#allocation2 + $0x30] sm:$0xff] %v2133
        %2146 = vst [vmem:[#allocation2 + $0x38] sm:$0xff] %v2134
        %2147 = vst [vmem:[#allocation2 + $0x40] sm:$0xff] %v2135
        %2148 = vst [vmem:[#allocation2 + $0x48] sm:$0xff] %v2136
        %2149 = vst [vmem:[#allocation2 + $0x50] sm:$0xff] %v2137
        %2150 = vst [vmem:[#allocation2 + $0x58] sm:$0xff] %v2138
        %p2151 = scmp.eq.s32.totalorder %s29, 5
        // Predicated region
        $region65: #{tpu_custom_call.1} parent=39 // pred_check
          %p2152 = pneg %p2151
        $region66: #{tpu_custom_call.1} parent=39 // pred_check_branch
          %2154 = sbr.rel (%p2152) target = $region68
        $region67: #{tpu_custom_call.1} parent=39 // pred_region
          %v2155 = vld [vmem:[#allocation2] sm:$0xff]
          %v2156 = vld [vmem:[#allocation2 + $0x8] sm:$0xff]
          %v2157 = vld [vmem:[#allocation2 + $0x10] sm:$0xff]
          %v2158 = vld [vmem:[#allocation2 + $0x18] sm:$0xff]
          %v2159 = vld [vmem:[#allocation2 + $0x20] sm:$0xff]
          %v2160 = vld [vmem:[#allocation2 + $0x28] sm:$0xff]
          %v2161 = vld [vmem:[#allocation2 + $0x30] sm:$0xff]
          %v2162 = vld [vmem:[#allocation2 + $0x38] sm:$0xff]
          %v2163 = vld [vmem:[#allocation2 + $0x40] sm:$0xff]
          %v2164 = vld [vmem:[#allocation2 + $0x48] sm:$0xff]
          %v2165 = vld [vmem:[#allocation2 + $0x50] sm:$0xff]
          %v2166 = vld [vmem:[#allocation2 + $0x58] sm:$0xff]
          %v2167 = vld [vmem:[#allocation11] sm:$0x3f]
          %v2169 = vlaneseq
          %v2170 = vshrl.u32 %v2169, 7
          %v2171 = vsub.s32 0, %v2170
          %v2172 = vrot.slane %v2167, %v2171
          %v2173 = vlaneseq
          %v2174 = vshrl.u32 %v2173, 7
          %v2175 = vsub.s32 1, %v2174
          %v2176 = vrot.slane %v2167, %v2175
          %v2177 = vlaneseq
          %v2178 = vshrl.u32 %v2177, 7
          %v2179 = vsub.s32 2, %v2178
          %v2180 = vrot.slane %v2167, %v2179
          %v2181 = vlaneseq
          %v2182 = vshrl.u32 %v2181, 7
          %v2183 = vsub.s32 3, %v2182
          %v2184 = vrot.slane %v2167, %v2183
          %v2185 = vlaneseq
          %v2186 = vshrl.u32 %v2185, 7
          %v2187 = vsub.s32 4, %v2186
          %v2188 = vrot.slane %v2167, %v2187
          %v2189 = vlaneseq
          %v2190 = vshrl.u32 %v2189, 7
          %v2191 = vsub.s32 5, %v2190
          %v2192 = vrot.slane %v2167, %v2191
          %v2199 = vadd.f32 %v2155, %v2172
          %v2200 = vadd.f32 %v2156, %v2176
          %v2201 = vadd.f32 %v2157, %v2180
          %v2202 = vadd.f32 %v2158, %v2184
          %v2203 = vadd.f32 %v2159, %v2188
          %v2204 = vadd.f32 %v2160, %v2192
          %v2205 = vadd.f32 %v2161, %v2172
          %v2206 = vadd.f32 %v2162, %v2176
          %v2207 = vadd.f32 %v2163, %v2180
          %v2208 = vadd.f32 %v2164, %v2184
          %v2209 = vadd.f32 %v2165, %v2188
          %v2210 = vadd.f32 %v2166, %v2192
          %2211 = vst [vmem:[#allocation12] sm:$0xff] %v2199
          %2212 = vst [vmem:[#allocation12 + $0x8] sm:$0xff] %v2200
          %2213 = vst [vmem:[#allocation12 + $0x10] sm:$0xff] %v2201
          %2214 = vst [vmem:[#allocation12 + $0x18] sm:$0xff] %v2202
          %2215 = vst [vmem:[#allocation12 + $0x20] sm:$0xff] %v2203
          %2216 = vst [vmem:[#allocation12 + $0x28] sm:$0xff] %v2204
          %2217 = vst [vmem:[#allocation12 + $0x30] sm:$0xff] %v2205
          %2218 = vst [vmem:[#allocation12 + $0x38] sm:$0xff] %v2206
          %2219 = vst [vmem:[#allocation12 + $0x40] sm:$0xff] %v2207
          %2220 = vst [vmem:[#allocation12 + $0x48] sm:$0xff] %v2208
          %2221 = vst [vmem:[#allocation12 + $0x50] sm:$0xff] %v2209
          %2222 = vst [vmem:[#allocation12 + $0x58] sm:$0xff] %v2210
        $region68: #{tpu_custom_call.1} parent=39 // pred_fallthru
          _
        // Predicated region
        $region69: #{tpu_custom_call.1} parent=39 // pred_check
          %p2223 = pneg %p179
        $region70: #{tpu_custom_call.1} parent=39 // pred_check_branch
          %2225 = sbr.rel (%p2223) target = $region72
        $region71: #{tpu_custom_call.1} parent=39 // pred_region
          %s2226 = smul.u32 2, %s28
          %s2228 = ssub.s32 1536, 1536
          %2229 = vsyncadd [#allocation5], %s2228
          %s2230 = smul.addr %s2226, 6
          %s2231 = smul.addr %s2230, 128
          %s2232 = scalar_lea.hbm %s5, %s2231
          %s2233 = sshll.u32 [#allocation12], 4
          %s2234 = int_to_ptr.vmem [resolvable:$true] %s2233
          %2239 = dma.vmem_to_hbm [thread:$0]  %s2234, 1536, %s2232, [#allocation5], 768, 768, 48
        $region72: #{tpu_custom_call.1} parent=39 // pred_fallthru
          _
        // Predicated region
        $region73: #{tpu_custom_call.1} parent=39 // pred_check
          %p2240 = pneg %p179
        $region74: #{tpu_custom_call.1} parent=39 // pred_check_branch
          %2242 = sbr.rel (%p2240) target = $region76
        $region75: #{tpu_custom_call.1} parent=39 // pred_region
          %2243 = dma.done [#allocation5], 1536
        $region76: #{tpu_custom_call.1} parent=39 // pred_fallthru
          _
      $region40: #{tpu_custom_call.1} parent=5 // pred_fallthru
        _
      %p2244 = scmp.le.s32.totalorder 2, %s19
      // Predicated region
      $region77: #{tpu_custom_call.1} parent=5 // pred_check
        %p2245 = pneg %p2244
      $region78: #{tpu_custom_call.1} parent=5 // pred_check_branch
        %2247 = sbr.rel (%p2245) target = $region80
      $region79: #{tpu_custom_call.1} parent=5 // pred_region
        %s2248 = ssub.s32 %s19, 2
      $region80: #{tpu_custom_call.1} parent=5 // pred_fallthru
        _
    $region6: #{tpu_custom_call.1} parent=1 // loop_footer
      %s23 = sadd.s32 1, %s19
    $region7: #{tpu_custom_call.1} parent=1 // loop_footer_branch
      %18 = sbr.rel target = $region3
    $region8: #{tpu_custom_call.1} parent=1 // loop_exit
      _
    %2249 = vsyncpa [#allocation4], 1
    %s2250 = scalar_lea.sflag [#allocation4], 1
    %2251 = vsyncpa %s2250, 1
    %2252 = vsyncpa [#allocation7], 1
    %s2253 = scalar_lea.sflag [#allocation7], 1
    %2254 = vsyncpa %s2253, 1
    %2255 = vsyncpa [#allocation10], 1
    %s2256 = scalar_lea.sflag [#allocation10], 1
    %2257 = vsyncpa %s2256, 1
    %2258 = vsyncpa [#allocation5], 1
    %s2259 = scalar_lea.sflag [#allocation5], 1
    %2260 = vsyncpa %s2259, 1

</llo_original>
